<compile_context>
chip_gen: v6e
topology: v6e:2x2x1
jax: 0.10.0
libtpu: 0.0.40
codegen_flags: <defaults>
</compile_context>

<pallas_src>
import functools

import jax
import jax.numpy as jnp
import numpy as np
from jax import lax
from jax.experimental import pallas as pl
from jax.experimental.pallas import tpu as pltpu


# dot_general dimension-numbers for `x @ W.T` with torch-layout W = (dout, din):
# contract the last dim of both operands (trans-B, MXU-native, no transpose op).
_TRANS_B = (((1,), (1,)), ((), ()))


def _concat(parts, axis):
    return parts[0] if len(parts) == 1 else jnp.concatenate(parts, axis=axis)


def _flatten_rows(row_slices):
    """Concat a list of (1, w) row slices along lanes -> (1, sum w) lane-dense slab."""
    return _concat(row_slices, axis=1)


# ---------------------------------------------------------------------------
# Fused MHA kernel: one grid step == one batch element
# ---------------------------------------------------------------------------

def _fused_mha_kernel(q_ref, k_ref, v_ref, m_ref, w_ref, bqkv_ref, bo_ref,
                      out_ref, attn_ref,
                      *, num_heads, depth, mxu_dtype, approx_recip):
    f32 = jnp.float32
    _, Sq, D = q_ref.shape
    Sk = k_ref.shape[1]

    # MXU operands in bf16 (f32 accumulation) on the fast path; VPU math stays f32.
    q = q_ref[0].astype(mxu_dtype)                       # (Sq, D)
    k = k_ref[0].astype(mxu_dtype)                       # (Sk, D)
    v = v_ref[0].astype(mxu_dtype)                       # (Sk, D)
    neg_mask = m_ref[0] * f32(-1e9)                      # un-broadcast; expands on VPU

    scale = f32(1.0 / float(np.sqrt(depth)))

    # Per-head projections via sublane-aligned weight-ROW slices (no lane-offset
    # activation slices); each projection is a full-K (=d_model) contraction.
    qh_l, kh_l, vh_l = [], [], []
    for h in range(num_heads):                           # unrolled at trace time
        lo = h * depth
        wq_h = w_ref[0, lo:lo + depth, :].astype(mxu_dtype)   # (depth, D)
        wk_h = w_ref[1, lo:lo + depth, :].astype(mxu_dtype)
        wv_h = w_ref[2, lo:lo + depth, :].astype(mxu_dtype)
        qh = lax.dot_general(q, wq_h, _TRANS_B, preferred_element_type=f32)
        kh = lax.dot_general(k, wk_h, _TRANS_B, preferred_element_type=f32)
        vh = lax.dot_general(v, wv_h, _TRANS_B, preferred_element_type=f32)
        # Fold 1/sqrt(depth) into Q (Sq*depth elems) instead of the full logits.
        qh_l.append((qh + bqkv_ref[0, h, :]) * scale)
        kh_l.append(kh + bqkv_ref[1, h, :])
        vh_l.append(vh + bqkv_ref[2, h, :])

    qh_all = jnp.stack(qh_l, axis=0).astype(mxu_dtype)   # (H, Sq, depth)
    kh_all = jnp.stack(kh_l, axis=0).astype(mxu_dtype)   # (H, Sk, depth)
    vh_all = jnp.stack(vh_l, axis=0).astype(mxu_dtype)   # (H, Sk, depth)

    # Head-batched attention: one contraction issue + one softmax over all heads.
    logits = jnp.einsum("hqd,hkd->hqk", qh_all, kh_all,
                        preferred_element_type=f32)      # (H, Sq, Sk) f32
    logits = logits + neg_mask
    logits = logits - jnp.max(logits, axis=-1, keepdims=True)
    p = jnp.exp(logits)
    denom = jnp.sum(p, axis=-1, keepdims=True)
    attn = p * pl.reciprocal(denom, approx=approx_recip)  # EUP slot when approx

    # Single coalesced, lane-dense store of all heads' attention weights.
    attn_ref[0] = _flatten_rows(
        [attn[h, s:s + 1, :] for h in range(num_heads) for s in range(Sq)])

    ctx = jnp.einsum("hqk,hkd->hqd", attn.astype(mxu_dtype), vh_all,
                     preferred_element_type=f32)          # (H, Sq, depth)

    # Re-assemble the (Sq, D) context along lanes -> ONE full-K output projection.
    ctx_full = _concat([ctx[h] for h in range(num_heads)], axis=-1)       # (Sq, D)
    out = lax.dot_general(ctx_full.astype(mxu_dtype), w_ref[3].astype(mxu_dtype),
                          _TRANS_B, preferred_element_type=f32) + bo_ref[...]

    # Lane-dense flat row store; wrapper reshapes back to (B, Sq, D).
    out_ref[0] = _flatten_rows([out[s:s + 1, :] for s in range(Sq)])


# ---------------------------------------------------------------------------
# Wrapper
# ---------------------------------------------------------------------------

def _normalize_mask(mask, batch):
    """Return (mask3d (Bm, mSq, mSk), index_map) without broadcasting to full size."""
    if mask is None:
        m = jnp.zeros((1, 1, 1), jnp.float32)
    else:
        m = jnp.asarray(mask, jnp.float32)
        if m.ndim == 4:
            assert m.shape[1] == 1  # TODO(synk): per-head masks
            m = m[:, 0]
        elif m.ndim == 2:
            m = m[None]
        assert m.ndim == 3
    bm = m.shape[0]
    if bm == batch:
        index_map = lambda b: (b, 0, 0)
    else:
        assert bm == 1
        index_map = lambda b: (0, 0, 0)
    return m, index_map


def _mha_forward_impl(params, v, k, q, mask, *, num_heads, precision="bf16"):
    B, Sq, D = q.shape
    Sk = k.shape[1]
    assert D % num_heads == 0
    depth = D // num_heads

    mask3, mask_map = _normalize_mask(mask, B)
    mSq, mSk = mask3.shape[1], mask3.shape[2]

    # Stack weights / biases so the kernel takes 7 inputs instead of 12.
    w_stack = jnp.stack([params["wq_w"], params["wk_w"],
                         params["wv_w"], params["dense_w"]], axis=0)        # (4, D, D)
    b_qkv = jnp.stack([params["wq_b"], params["wk_b"], params["wv_b"]],
                      axis=0).reshape(3, num_heads, depth)                  # (3, H, depth)
    b_o = params["dense_b"].reshape(1, D)

    mxu_dtype = jnp.bfloat16 if precision == "bf16" else jnp.float32
    kernel = functools.partial(_fused_mha_kernel, num_heads=num_heads, depth=depth,
                               mxu_dtype=mxu_dtype,
                               approx_recip=(precision == "bf16"))

    full3 = lambda b: (0, 0, 0)

    out_flat, attn_flat = pl.pallas_call(
        kernel,
        grid=(B,),
        in_specs=[
            pl.BlockSpec((1, Sq, D), lambda b: (b, 0, 0)),     # q
            pl.BlockSpec((1, Sk, D), lambda b: (b, 0, 0)),     # k
            pl.BlockSpec((1, Sk, D), lambda b: (b, 0, 0)),     # v
            pl.BlockSpec((1, mSq, mSk), mask_map),             # mask (un-broadcast)
            # TODO(synk): at real D, pass weights via pl.ANY + one-time DMA to avoid
            #             double-buffered DxD weight residency on v7x's 64 MiB VMEM.
            pl.BlockSpec((4, D, D), full3),                    # [wq, wk, wv, wo]
            pl.BlockSpec((3, num_heads, depth), full3),        # [bq, bk, bv] per head
            pl.BlockSpec((1, D), lambda b: (0, 0)),            # bo
        ],
        out_specs=(
            pl.BlockSpec((1, 1, Sq * D), lambda b: (b, 0, 0)),
            pl.BlockSpec((1, 1, num_heads * Sq * Sk), lambda b: (b, 0, 0)),
        ),
        out_shape=(
            jax.ShapeDtypeStruct((B, 1, Sq * D), jnp.float32),
            jax.ShapeDtypeStruct((B, 1, num_heads * Sq * Sk), jnp.float32),
        ),
        compiler_params=pltpu.CompilerParams(
            dimension_semantics=("parallel",),   # batch shards across TCs on v7x
        ),
    )(q, k, v, mask3, w_stack, b_qkv, b_o)

    out = out_flat.reshape(B, Sq, D)
    attn = attn_flat.reshape(B, num_heads, Sq, Sk)
    return out, attn


mha_forward = jax.jit(_mha_forward_impl, static_argnames=("num_heads", "precision"))


# ---------------------------------------------------------------------------
# Pure-JAX reference (optionally with matched MXU-operand precision)
# ---------------------------------------------------------------------------

def _ref_mha(p, v, k, q, mask, num_heads, mxu_dtype=jnp.float32):
    B, Sq, D = q.shape
    Sk = k.shape[1]
    depth = D // num_heads
    md, f32 = mxu_dtype, jnp.float32
    dot = lambda a, b: jnp.dot(a.astype(md), b.astype(md), preferred_element_type=f32)
    q2 = dot(q, p["wq_w"].T) + p["wq_b"]
    k2 = dot(k, p["wk_w"].T) + p["wk_b"]
    v2 = dot(v, p["wv_w"].T) + p["wv_b"]
    sh = lambda t, s: t.reshape(B, s, num_heads, depth).transpose(0, 2, 1, 3)
    qh, kh, vh = sh(q2, Sq), sh(k2, Sk), sh(v2, Sk)
    logits = jnp.einsum("bhqd,bhkd->bhqk", qh.astype(md), kh.astype(md),
                        preferred_element_type=f32) / jnp.sqrt(f32(depth))
    if mask is not None:
        logits = logits + mask * (-1e9)
    attn = jax.nn.softmax(logits, axis=-1)
    o = jnp.einsum("bhqk,bhkd->bhqd", attn.astype(md), vh.astype(md),
                   preferred_element_type=f32)
    o = o.transpose(0, 2, 1, 3).reshape(B, Sq, D)
    return dot(o, p["dense_w"].T) + p["dense_b"], attn


# ---------------------------------------------------------------------------
# Params + main
# ---------------------------------------------------------------------------

def init_params(key, d_model):
    keys = jax.random.split(key, 4)

    def lin(kk, dout, din):
        w = jax.random.normal(kk, (dout, din), jnp.float32) * (1.0 / np.sqrt(din))
        b = jnp.full((dout,), 0.01, jnp.float32)
        return w, b

    wq_w, wq_b = lin(keys[0], d_model, d_model)
    wk_w, wk_b = lin(keys[1], d_model, d_model)
    wv_w, wv_b = lin(keys[2], d_model, d_model)
    dw, db = lin(keys[3], d_model, d_model)
    return dict(wq_w=wq_w, wq_b=wq_b, wk_w=wk_w, wk_b=wk_b,
                wv_w=wv_w, wv_b=wv_b, dense_w=dw, dense_b=db)


if __name__ == "__main__":
    B, S, S_ENC = 2, 8, 16
    D_MODEL, NUM_HEADS = 32, 4

    root = jax.random.PRNGKey(0)
    k_p, k_x, k_e = jax.random.split(root, 3)

    params = init_params(k_p, D_MODEL)
    x = jax.random.normal(k_x, (B, S, D_MODEL), jnp.float32)
    enc = jax.random.normal(k_e, (B, S_ENC, D_MODEL), jnp.float32)

    # Case 1: self-attention with a look-ahead (causal) mask, shape (1,1,S,S).
    la_mask = jnp.triu(jnp.ones((S, S), jnp.float32), k=1).reshape(1, 1, S, S)
    # Case 2: cross-attention (q from x, k/v from enc) with a padding mask (B,1,1,S_ENC).
    pad_mask = jnp.zeros((B, 1, 1, S_ENC), jnp.float32).at[1, 0, 0, -4:].set(1.0)

    # Default fast path: bf16 MXU operands + approx softmax reciprocal.
    out1, attn1 = mha_forward(params, x, x, x, la_mask, num_heads=NUM_HEADS)
    out2, attn2 = mha_forward(params, enc, enc, x, pad_mask, num_heads=NUM_HEADS)
    # Exact path: f32 MXU operands + exact reciprocal, for tight verification.
    out1f, attn1f = mha_forward(params, x, x, x, la_mask,
                                num_heads=NUM_HEADS, precision="f32")
    out2f, attn2f = mha_forward(params, enc, enc, x, pad_mask,
                                num_heads=NUM_HEADS, precision="f32")
    for t in (out1, attn1, out2, attn2, out1f, attn1f, out2f, attn2f):
        jax.block_until_ready(t)

    # f32 path must match the pure-JAX reference tightly (module semantics).
    r1 = _ref_mha(params, x, x, x, la_mask, NUM_HEADS)
    r2 = _ref_mha(params, enc, enc, x, pad_mask, NUM_HEADS)
    np.testing.assert_allclose(np.asarray(out1f), np.asarray(r1[0]), rtol=1e-4, atol=1e-4)
    np.testing.assert_allclose(np.asarray(attn1f), np.asarray(r1[1]), rtol=1e-4, atol=1e-4)
    np.testing.assert_allclose(np.asarray(out2f), np.asarray(r2[0]), rtol=1e-4, atol=1e-4)
    np.testing.assert_allclose(np.asarray(attn2f), np.asarray(r2[1]), rtol=1e-4, atol=1e-4)

    # bf16 MXU path vs a matched-precision reference (tolerance also covers the
    # approx reciprocal and MXU accumulation-order differences).
    b1 = _ref_mha(params, x, x, x, la_mask, NUM_HEADS, mxu_dtype=jnp.bfloat16)
    b2 = _ref_mha(params, enc, enc, x, pad_mask, NUM_HEADS, mxu_dtype=jnp.bfloat16)
    np.testing.assert_allclose(np.asarray(out1), np.asarray(b1[0]), rtol=2e-2, atol=2e-2)
    np.testing.assert_allclose(np.asarray(attn1), np.asarray(b1[1]), rtol=2e-2, atol=2e-2)
    np.testing.assert_allclose(np.asarray(out2), np.asarray(b2[0]), rtol=2e-2, atol=2e-2)
    np.testing.assert_allclose(np.asarray(attn2), np.asarray(b2[1]), rtol=2e-2, atol=2e-2)

    print("KERNEL_OK")
</pallas_src>

<mosaic_0001>
module attributes {stable_mosaic.version = 11 : i64} {
  func.func @_fused_mha_kernel(%arg0: i32, %arg1: memref<1x8x32xf32, #tpu.memory_space<vmem>>, %arg2: memref<1x8x32xf32, #tpu.memory_space<vmem>>, %arg3: memref<1x8x32xf32, #tpu.memory_space<vmem>>, %arg4: memref<1x8x8xf32, #tpu.memory_space<vmem>>, %arg5: memref<4x32x32xf32, #tpu.memory_space<vmem>>, %arg6: memref<3x4x8xf32, #tpu.memory_space<vmem>>, %arg7: memref<1x32xf32, #tpu.memory_space<vmem>>, %arg8: memref<1x1x256xf32, #tpu.memory_space<vmem>>, %arg9: memref<1x1x256xf32, #tpu.memory_space<vmem>>) attributes {dimension_semantics = [#tpu.dimension_semantics<parallel>], iteration_bounds = array<i64: 2>, scalar_prefetch = 0 : i64, scratch_operands = 0 : i64, tpu.core_type = #tpu.core_type<tc>, window_params = [{transform_indices = @transform_0, window_bounds = array<i64: 1, 8, 32>}, {transform_indices = @transform_1, window_bounds = array<i64: 1, 8, 32>}, {transform_indices = @transform_2, window_bounds = array<i64: 1, 8, 32>}, {pipeline_mode = #tpu.pipeline_mode<synchronous>, transform_indices = @transform_3, window_bounds = array<i64: 1, 8, 8>}, {pipeline_mode = #tpu.pipeline_mode<synchronous>, transform_indices = @transform_4, window_bounds = array<i64: 4, 32, 32>}, {pipeline_mode = #tpu.pipeline_mode<synchronous>, transform_indices = @transform_5, window_bounds = array<i64: 3, 4, 8>}, {pipeline_mode = #tpu.pipeline_mode<synchronous>, transform_indices = @transform_6, window_bounds = array<i64: 1, 32>}, {transform_indices = @transform_7, window_bounds = array<i64: 1, 1, 256>}, {transform_indices = @transform_8, window_bounds = array<i64: 1, 1, 256>}]} {
    %c0 = arith.constant 0 : index
    %c0_0 = arith.constant 0 : index
    %c0_1 = arith.constant 0 : index
    %0 = vector.load %arg1[%c0, %c0_0, %c0_1] : memref<1x8x32xf32, #tpu.memory_space<vmem>>, vector<1x8x32xf32>
    %1 = vector.shape_cast %0 : vector<1x8x32xf32> to vector<8x32xf32>
    %2 = arith.truncf %1 : vector<8x32xf32> to vector<8x32xbf16>
    %c0_2 = arith.constant 0 : index
    %c0_3 = arith.constant 0 : index
    %c0_4 = arith.constant 0 : index
    %3 = vector.load %arg2[%c0_2, %c0_3, %c0_4] : memref<1x8x32xf32, #tpu.memory_space<vmem>>, vector<1x8x32xf32>
    %4 = vector.shape_cast %3 : vector<1x8x32xf32> to vector<8x32xf32>
    %5 = arith.truncf %4 : vector<8x32xf32> to vector<8x32xbf16>
    %c0_5 = arith.constant 0 : index
    %c0_6 = arith.constant 0 : index
    %c0_7 = arith.constant 0 : index
    %6 = vector.load %arg3[%c0_5, %c0_6, %c0_7] : memref<1x8x32xf32, #tpu.memory_space<vmem>>, vector<1x8x32xf32>
    %7 = vector.shape_cast %6 : vector<1x8x32xf32> to vector<8x32xf32>
    %8 = arith.truncf %7 : vector<8x32xf32> to vector<8x32xbf16>
    %c0_8 = arith.constant 0 : index
    %c0_9 = arith.constant 0 : index
    %c0_10 = arith.constant 0 : index
    %9 = vector.load %arg4[%c0_8, %c0_9, %c0_10] : memref<1x8x8xf32, #tpu.memory_space<vmem>>, vector<1x8x8xf32>
    %10 = vector.shape_cast %9 : vector<1x8x8xf32> to vector<8x8xf32>
    %cst = arith.constant -1.000000e+09 : f32
    %11 = vector.broadcast %cst : f32 to vector<8x8xf32>
    %12 = arith.mulf %10, %11 : vector<8x8xf32>
    %c0_11 = arith.constant 0 : index
    %c0_12 = arith.constant 0 : index
    %c0_13 = arith.constant 0 : index
    %13 = vector.load %arg5[%c0_11, %c0_12, %c0_13] : memref<4x32x32xf32, #tpu.memory_space<vmem>>, vector<1x8x32xf32>
    %14 = vector.shape_cast %13 : vector<1x8x32xf32> to vector<8x32xf32>
    %15 = arith.truncf %14 : vector<8x32xf32> to vector<8x32xbf16>
    %c1 = arith.constant 1 : index
    %c0_14 = arith.constant 0 : index
    %c0_15 = arith.constant 0 : index
    %16 = vector.load %arg5[%c1, %c0_14, %c0_15] : memref<4x32x32xf32, #tpu.memory_space<vmem>>, vector<1x8x32xf32>
    %17 = vector.shape_cast %16 : vector<1x8x32xf32> to vector<8x32xf32>
    %18 = arith.truncf %17 : vector<8x32xf32> to vector<8x32xbf16>
    %c2 = arith.constant 2 : index
    %c0_16 = arith.constant 0 : index
    %c0_17 = arith.constant 0 : index
    %19 = vector.load %arg5[%c2, %c0_16, %c0_17] : memref<4x32x32xf32, #tpu.memory_space<vmem>>, vector<1x8x32xf32>
    %20 = vector.shape_cast %19 : vector<1x8x32xf32> to vector<8x32xf32>
    %21 = arith.truncf %20 : vector<8x32xf32> to vector<8x32xbf16>
    %cst_18 = arith.constant dense<0.000000e+00> : vector<8x8xf32>
    %22 = tpu.matmul %2, %15, %cst_18 {dimension_numbers = #tpu.dot_dimension_numbers<[1], [1], [0], [0], [0, 0, 1, 0], [], []>} : vector<8x32xbf16>, vector<8x32xbf16>, vector<8x8xf32> -> vector<8x8xf32>
    %cst_19 = arith.constant dense<0.000000e+00> : vector<8x8xf32>
    %23 = tpu.matmul %5, %18, %cst_19 {dimension_numbers = #tpu.dot_dimension_numbers<[1], [1], [0], [0], [0, 0, 1, 0], [], []>} : vector<8x32xbf16>, vector<8x32xbf16>, vector<8x8xf32> -> vector<8x8xf32>
    %cst_20 = arith.constant dense<0.000000e+00> : vector<8x8xf32>
    %24 = tpu.matmul %8, %21, %cst_20 {dimension_numbers = #tpu.dot_dimension_numbers<[1], [1], [0], [0], [0, 0, 1, 0], [], []>} : vector<8x32xbf16>, vector<8x32xbf16>, vector<8x8xf32> -> vector<8x8xf32>
    %c0_21 = arith.constant 0 : index
    %c0_22 = arith.constant 0 : index
    %c0_23 = arith.constant 0 : index
    %25 = vector.load %arg6[%c0_21, %c0_22, %c0_23] : memref<3x4x8xf32, #tpu.memory_space<vmem>>, vector<1x1x8xf32>
    %26 = vector.shape_cast %25 : vector<1x1x8xf32> to vector<8xf32>
    %27 = vector.shape_cast %26 : vector<8xf32> to vector<1x8xf32>
    %28 = vector.broadcast %27 : vector<1x8xf32> to vector<8x8xf32>
    %29 = arith.addf %22, %28 : vector<8x8xf32>
    %cst_24 = arith.constant 0.353553385 : f32
    %30 = vector.broadcast %cst_24 : f32 to vector<8x8xf32>
    %31 = arith.mulf %29, %30 : vector<8x8xf32>
    %c1_25 = arith.constant 1 : index
    %c0_26 = arith.constant 0 : index
    %c0_27 = arith.constant 0 : index
    %32 = vector.load %arg6[%c1_25, %c0_26, %c0_27] : memref<3x4x8xf32, #tpu.memory_space<vmem>>, vector<1x1x8xf32>
    %33 = vector.shape_cast %32 : vector<1x1x8xf32> to vector<8xf32>
    %34 = vector.shape_cast %33 : vector<8xf32> to vector<1x8xf32>
    %35 = vector.broadcast %34 : vector<1x8xf32> to vector<8x8xf32>
    %36 = arith.addf %23, %35 : vector<8x8xf32>
    %c2_28 = arith.constant 2 : index
    %c0_29 = arith.constant 0 : index
    %c0_30 = arith.constant 0 : index
    %37 = vector.load %arg6[%c2_28, %c0_29, %c0_30] : memref<3x4x8xf32, #tpu.memory_space<vmem>>, vector<1x1x8xf32>
    %38 = vector.shape_cast %37 : vector<1x1x8xf32> to vector<8xf32>
    %39 = vector.shape_cast %38 : vector<8xf32> to vector<1x8xf32>
    %40 = vector.broadcast %39 : vector<1x8xf32> to vector<8x8xf32>
    %41 = arith.addf %24, %40 : vector<8x8xf32>
    %c0_31 = arith.constant 0 : index
    %c8 = arith.constant 8 : index
    %c0_32 = arith.constant 0 : index
    %42 = vector.load %arg5[%c0_31, %c8, %c0_32] : memref<4x32x32xf32, #tpu.memory_space<vmem>>, vector<1x8x32xf32>
    %43 = vector.shape_cast %42 : vector<1x8x32xf32> to vector<8x32xf32>
    %44 = arith.truncf %43 : vector<8x32xf32> to vector<8x32xbf16>
    %c1_33 = arith.constant 1 : index
    %c8_34 = arith.constant 8 : index
    %c0_35 = arith.constant 0 : index
    %45 = vector.load %arg5[%c1_33, %c8_34, %c0_35] : memref<4x32x32xf32, #tpu.memory_space<vmem>>, vector<1x8x32xf32>
    %46 = vector.shape_cast %45 : vector<1x8x32xf32> to vector<8x32xf32>
    %47 = arith.truncf %46 : vector<8x32xf32> to vector<8x32xbf16>
    %c2_36 = arith.constant 2 : index
    %c8_37 = arith.constant 8 : index
    %c0_38 = arith.constant 0 : index
    %48 = vector.load %arg5[%c2_36, %c8_37, %c0_38] : memref<4x32x32xf32, #tpu.memory_space<vmem>>, vector<1x8x32xf32>
    %49 = vector.shape_cast %48 : vector<1x8x32xf32> to vector<8x32xf32>
    %50 = arith.truncf %49 : vector<8x32xf32> to vector<8x32xbf16>
    %cst_39 = arith.constant dense<0.000000e+00> : vector<8x8xf32>
    %51 = tpu.matmul %2, %44, %cst_39 {dimension_numbers = #tpu.dot_dimension_numbers<[1], [1], [0], [0], [0, 0, 1, 0], [], []>} : vector<8x32xbf16>, vector<8x32xbf16>, vector<8x8xf32> -> vector<8x8xf32>
    %cst_40 = arith.constant dense<0.000000e+00> : vector<8x8xf32>
    %52 = tpu.matmul %5, %47, %cst_40 {dimension_numbers = #tpu.dot_dimension_numbers<[1], [1], [0], [0], [0, 0, 1, 0], [], []>} : vector<8x32xbf16>, vector<8x32xbf16>, vector<8x8xf32> -> vector<8x8xf32>
    %cst_41 = arith.constant dense<0.000000e+00> : vector<8x8xf32>
    %53 = tpu.matmul %8, %50, %cst_41 {dimension_numbers = #tpu.dot_dimension_numbers<[1], [1], [0], [0], [0, 0, 1, 0], [], []>} : vector<8x32xbf16>, vector<8x32xbf16>, vector<8x8xf32> -> vector<8x8xf32>
    %c0_42 = arith.constant 0 : index
    %c1_43 = arith.constant 1 : index
    %c0_44 = arith.constant 0 : index
    %54 = vector.load %arg6[%c0_42, %c1_43, %c0_44] : memref<3x4x8xf32, #tpu.memory_space<vmem>>, vector<1x1x8xf32>
    %55 = vector.shape_cast %54 : vector<1x1x8xf32> to vector<8xf32>
    %56 = vector.shape_cast %55 : vector<8xf32> to vector<1x8xf32>
    %57 = vector.broadcast %56 : vector<1x8xf32> to vector<8x8xf32>
    %58 = arith.addf %51, %57 : vector<8x8xf32>
    %cst_45 = arith.constant 0.353553385 : f32
    %59 = vector.broadcast %cst_45 : f32 to vector<8x8xf32>
    %60 = arith.mulf %58, %59 : vector<8x8xf32>
    %c1_46 = arith.constant 1 : index
    %c1_47 = arith.constant 1 : index
    %c0_48 = arith.constant 0 : index
    %61 = vector.load %arg6[%c1_46, %c1_47, %c0_48] : memref<3x4x8xf32, #tpu.memory_space<vmem>>, vector<1x1x8xf32>
    %62 = vector.shape_cast %61 : vector<1x1x8xf32> to vector<8xf32>
    %63 = vector.shape_cast %62 : vector<8xf32> to vector<1x8xf32>
    %64 = vector.broadcast %63 : vector<1x8xf32> to vector<8x8xf32>
    %65 = arith.addf %52, %64 : vector<8x8xf32>
    %c2_49 = arith.constant 2 : index
    %c1_50 = arith.constant 1 : index
    %c0_51 = arith.constant 0 : index
    %66 = vector.load %arg6[%c2_49, %c1_50, %c0_51] : memref<3x4x8xf32, #tpu.memory_space<vmem>>, vector<1x1x8xf32>
    %67 = vector.shape_cast %66 : vector<1x1x8xf32> to vector<8xf32>
    %68 = vector.shape_cast %67 : vector<8xf32> to vector<1x8xf32>
    %69 = vector.broadcast %68 : vector<1x8xf32> to vector<8x8xf32>
    %70 = arith.addf %53, %69 : vector<8x8xf32>
    %c0_52 = arith.constant 0 : index
    %c16 = arith.constant 16 : index
    %c0_53 = arith.constant 0 : index
    %71 = vector.load %arg5[%c0_52, %c16, %c0_53] : memref<4x32x32xf32, #tpu.memory_space<vmem>>, vector<1x8x32xf32>
    %72 = vector.shape_cast %71 : vector<1x8x32xf32> to vector<8x32xf32>
    %73 = arith.truncf %72 : vector<8x32xf32> to vector<8x32xbf16>
    %c1_54 = arith.constant 1 : index
    %c16_55 = arith.constant 16 : index
    %c0_56 = arith.constant 0 : index
    %74 = vector.load %arg5[%c1_54, %c16_55, %c0_56] : memref<4x32x32xf32, #tpu.memory_space<vmem>>, vector<1x8x32xf32>
    %75 = vector.shape_cast %74 : vector<1x8x32xf32> to vector<8x32xf32>
    %76 = arith.truncf %75 : vector<8x32xf32> to vector<8x32xbf16>
    %c2_57 = arith.constant 2 : index
    %c16_58 = arith.constant 16 : index
    %c0_59 = arith.constant 0 : index
    %77 = vector.load %arg5[%c2_57, %c16_58, %c0_59] : memref<4x32x32xf32, #tpu.memory_space<vmem>>, vector<1x8x32xf32>
    %78 = vector.shape_cast %77 : vector<1x8x32xf32> to vector<8x32xf32>
    %79 = arith.truncf %78 : vector<8x32xf32> to vector<8x32xbf16>
    %cst_60 = arith.constant dense<0.000000e+00> : vector<8x8xf32>
    %80 = tpu.matmul %2, %73, %cst_60 {dimension_numbers = #tpu.dot_dimension_numbers<[1], [1], [0], [0], [0, 0, 1, 0], [], []>} : vector<8x32xbf16>, vector<8x32xbf16>, vector<8x8xf32> -> vector<8x8xf32>
    %cst_61 = arith.constant dense<0.000000e+00> : vector<8x8xf32>
    %81 = tpu.matmul %5, %76, %cst_61 {dimension_numbers = #tpu.dot_dimension_numbers<[1], [1], [0], [0], [0, 0, 1, 0], [], []>} : vector<8x32xbf16>, vector<8x32xbf16>, vector<8x8xf32> -> vector<8x8xf32>
    %cst_62 = arith.constant dense<0.000000e+00> : vector<8x8xf32>
    %82 = tpu.matmul %8, %79, %cst_62 {dimension_numbers = #tpu.dot_dimension_numbers<[1], [1], [0], [0], [0, 0, 1, 0], [], []>} : vector<8x32xbf16>, vector<8x32xbf16>, vector<8x8xf32> -> vector<8x8xf32>
    %c0_63 = arith.constant 0 : index
    %c2_64 = arith.constant 2 : index
    %c0_65 = arith.constant 0 : index
    %83 = vector.load %arg6[%c0_63, %c2_64, %c0_65] : memref<3x4x8xf32, #tpu.memory_space<vmem>>, vector<1x1x8xf32>
    %84 = vector.shape_cast %83 : vector<1x1x8xf32> to vector<8xf32>
    %85 = vector.shape_cast %84 : vector<8xf32> to vector<1x8xf32>
    %86 = vector.broadcast %85 : vector<1x8xf32> to vector<8x8xf32>
    %87 = arith.addf %80, %86 : vector<8x8xf32>
    %cst_66 = arith.constant 0.353553385 : f32
    %88 = vector.broadcast %cst_66 : f32 to vector<8x8xf32>
    %89 = arith.mulf %87, %88 : vector<8x8xf32>
    %c1_67 = arith.constant 1 : index
    %c2_68 = arith.constant 2 : index
    %c0_69 = arith.constant 0 : index
    %90 = vector.load %arg6[%c1_67, %c2_68, %c0_69] : memref<3x4x8xf32, #tpu.memory_space<vmem>>, vector<1x1x8xf32>
    %91 = vector.shape_cast %90 : vector<1x1x8xf32> to vector<8xf32>
    %92 = vector.shape_cast %91 : vector<8xf32> to vector<1x8xf32>
    %93 = vector.broadcast %92 : vector<1x8xf32> to vector<8x8xf32>
    %94 = arith.addf %81, %93 : vector<8x8xf32>
    %c2_70 = arith.constant 2 : index
    %c2_71 = arith.constant 2 : index
    %c0_72 = arith.constant 0 : index
    %95 = vector.load %arg6[%c2_70, %c2_71, %c0_72] : memref<3x4x8xf32, #tpu.memory_space<vmem>>, vector<1x1x8xf32>
    %96 = vector.shape_cast %95 : vector<1x1x8xf32> to vector<8xf32>
    %97 = vector.shape_cast %96 : vector<8xf32> to vector<1x8xf32>
    %98 = vector.broadcast %97 : vector<1x8xf32> to vector<8x8xf32>
    %99 = arith.addf %82, %98 : vector<8x8xf32>
    %c0_73 = arith.constant 0 : index
    %c24 = arith.constant 24 : index
    %c0_74 = arith.constant 0 : index
    %100 = vector.load %arg5[%c0_73, %c24, %c0_74] : memref<4x32x32xf32, #tpu.memory_space<vmem>>, vector<1x8x32xf32>
    %101 = vector.shape_cast %100 : vector<1x8x32xf32> to vector<8x32xf32>
    %102 = arith.truncf %101 : vector<8x32xf32> to vector<8x32xbf16>
    %c1_75 = arith.constant 1 : index
    %c24_76 = arith.constant 24 : index
    %c0_77 = arith.constant 0 : index
    %103 = vector.load %arg5[%c1_75, %c24_76, %c0_77] : memref<4x32x32xf32, #tpu.memory_space<vmem>>, vector<1x8x32xf32>
    %104 = vector.shape_cast %103 : vector<1x8x32xf32> to vector<8x32xf32>
    %105 = arith.truncf %104 : vector<8x32xf32> to vector<8x32xbf16>
    %c2_78 = arith.constant 2 : index
    %c24_79 = arith.constant 24 : index
    %c0_80 = arith.constant 0 : index
    %106 = vector.load %arg5[%c2_78, %c24_79, %c0_80] : memref<4x32x32xf32, #tpu.memory_space<vmem>>, vector<1x8x32xf32>
    %107 = vector.shape_cast %106 : vector<1x8x32xf32> to vector<8x32xf32>
    %108 = arith.truncf %107 : vector<8x32xf32> to vector<8x32xbf16>
    %cst_81 = arith.constant dense<0.000000e+00> : vector<8x8xf32>
    %109 = tpu.matmul %2, %102, %cst_81 {dimension_numbers = #tpu.dot_dimension_numbers<[1], [1], [0], [0], [0, 0, 1, 0], [], []>} : vector<8x32xbf16>, vector<8x32xbf16>, vector<8x8xf32> -> vector<8x8xf32>
    %cst_82 = arith.constant dense<0.000000e+00> : vector<8x8xf32>
    %110 = tpu.matmul %5, %105, %cst_82 {dimension_numbers = #tpu.dot_dimension_numbers<[1], [1], [0], [0], [0, 0, 1, 0], [], []>} : vector<8x32xbf16>, vector<8x32xbf16>, vector<8x8xf32> -> vector<8x8xf32>
    %cst_83 = arith.constant dense<0.000000e+00> : vector<8x8xf32>
    %111 = tpu.matmul %8, %108, %cst_83 {dimension_numbers = #tpu.dot_dimension_numbers<[1], [1], [0], [0], [0, 0, 1, 0], [], []>} : vector<8x32xbf16>, vector<8x32xbf16>, vector<8x8xf32> -> vector<8x8xf32>
    %c0_84 = arith.constant 0 : index
    %c3 = arith.constant 3 : index
    %c0_85 = arith.constant 0 : index
    %112 = vector.load %arg6[%c0_84, %c3, %c0_85] : memref<3x4x8xf32, #tpu.memory_space<vmem>>, vector<1x1x8xf32>
    %113 = vector.shape_cast %112 : vector<1x1x8xf32> to vector<8xf32>
    %114 = vector.shape_cast %113 : vector<8xf32> to vector<1x8xf32>
    %115 = vector.broadcast %114 : vector<1x8xf32> to vector<8x8xf32>
    %116 = arith.addf %109, %115 : vector<8x8xf32>
    %cst_86 = arith.constant 0.353553385 : f32
    %117 = vector.broadcast %cst_86 : f32 to vector<8x8xf32>
    %118 = arith.mulf %116, %117 : vector<8x8xf32>
    %c1_87 = arith.constant 1 : index
    %c3_88 = arith.constant 3 : index
    %c0_89 = arith.constant 0 : index
    %119 = vector.load %arg6[%c1_87, %c3_88, %c0_89] : memref<3x4x8xf32, #tpu.memory_space<vmem>>, vector<1x1x8xf32>
    %120 = vector.shape_cast %119 : vector<1x1x8xf32> to vector<8xf32>
    %121 = vector.shape_cast %120 : vector<8xf32> to vector<1x8xf32>
    %122 = vector.broadcast %121 : vector<1x8xf32> to vector<8x8xf32>
    %123 = arith.addf %110, %122 : vector<8x8xf32>
    %c2_90 = arith.constant 2 : index
    %c3_91 = arith.constant 3 : index
    %c0_92 = arith.constant 0 : index
    %124 = vector.load %arg6[%c2_90, %c3_91, %c0_92] : memref<3x4x8xf32, #tpu.memory_space<vmem>>, vector<1x1x8xf32>
    %125 = vector.shape_cast %124 : vector<1x1x8xf32> to vector<8xf32>
    %126 = vector.shape_cast %125 : vector<8xf32> to vector<1x8xf32>
    %127 = vector.broadcast %126 : vector<1x8xf32> to vector<8x8xf32>
    %128 = arith.addf %111, %127 : vector<8x8xf32>
    %129 = vector.shape_cast %31 : vector<8x8xf32> to vector<1x8x8xf32>
    %130 = vector.shape_cast %60 : vector<8x8xf32> to vector<1x8x8xf32>
    %131 = vector.shape_cast %89 : vector<8x8xf32> to vector<1x8x8xf32>
    %132 = vector.shape_cast %118 : vector<8x8xf32> to vector<1x8x8xf32>
    %133 = tpu.concatenate %129, %130, %131, %132 in 0 : vector<1x8x8xf32>, vector<1x8x8xf32>, vector<1x8x8xf32>, vector<1x8x8xf32> -> vector<4x8x8xf32>
    %134 = arith.truncf %133 : vector<4x8x8xf32> to vector<4x8x8xbf16>
    %135 = vector.shape_cast %36 : vector<8x8xf32> to vector<1x8x8xf32>
    %136 = vector.shape_cast %65 : vector<8x8xf32> to vector<1x8x8xf32>
    %137 = vector.shape_cast %94 : vector<8x8xf32> to vector<1x8x8xf32>
    %138 = vector.shape_cast %123 : vector<8x8xf32> to vector<1x8x8xf32>
    %139 = tpu.concatenate %135, %136, %137, %138 in 0 : vector<1x8x8xf32>, vector<1x8x8xf32>, vector<1x8x8xf32>, vector<1x8x8xf32> -> vector<4x8x8xf32>
    %140 = arith.truncf %139 : vector<4x8x8xf32> to vector<4x8x8xbf16>
    %141 = vector.shape_cast %41 : vector<8x8xf32> to vector<1x8x8xf32>
    %142 = vector.shape_cast %70 : vector<8x8xf32> to vector<1x8x8xf32>
    %143 = vector.shape_cast %99 : vector<8x8xf32> to vector<1x8x8xf32>
    %144 = vector.shape_cast %128 : vector<8x8xf32> to vector<1x8x8xf32>
    %145 = tpu.concatenate %141, %142, %143, %144 in 0 : vector<1x8x8xf32>, vector<1x8x8xf32>, vector<1x8x8xf32>, vector<1x8x8xf32> -> vector<4x8x8xf32>
    %146 = arith.truncf %145 : vector<4x8x8xf32> to vector<4x8x8xbf16>
    "tpu.trace_start"() <{level = 10 : i32, message = "hqd,hkd->hqk"}> : () -> ()
    %cst_93 = arith.constant dense<0.000000e+00> : vector<4x8x8xf32>
    %147 = tpu.matmul %134, %140, %cst_93 {dimension_numbers = #tpu.dot_dimension_numbers<[2], [2], [1], [1], [0, 0, 0, 1, 1, 1], [0], [0]>} : vector<4x8x8xbf16>, vector<4x8x8xbf16>, vector<4x8x8xf32> -> vector<4x8x8xf32>
    "tpu.trace_stop"() : () -> ()
    %148 = vector.shape_cast %12 : vector<8x8xf32> to vector<1x8x8xf32>
    %149 = vector.broadcast %148 : vector<1x8x8xf32> to vector<4x8x8xf32>
    %150 = arith.addf %147, %149 : vector<4x8x8xf32>
    %cst_94 = arith.constant dense<0xFF800000> : vector<4x8xf32>
    %151 = vector.multi_reduction <maximumf>, %150, %cst_94 [2] : vector<4x8x8xf32> to vector<4x8xf32>
    %152 = vector.shape_cast %151 : vector<4x8xf32> to vector<4x8x1xf32>
    %153 = vector.broadcast %152 : vector<4x8x1xf32> to vector<4x8x8xf32>
    %154 = arith.subf %150, %153 : vector<4x8x8xf32>
    %155 = math.exp %154 : vector<4x8x8xf32>
    %cst_95 = arith.constant dense<0.000000e+00> : vector<4x8xf32>
    %156 = vector.multi_reduction <add>, %155, %cst_95 [2] : vector<4x8x8xf32> to vector<4x8xf32>
    %157 = vector.shape_cast %156 : vector<4x8xf32> to vector<4x8x1xf32>
    %158 = tpu.reciprocal %157 {approx = true} : vector<4x8x1xf32> -> vector<4x8x1xf32>
    %159 = vector.broadcast %158 : vector<4x8x1xf32> to vector<4x8x8xf32>
    %160 = arith.mulf %155, %159 : vector<4x8x8xf32>
    %161 = vector.extract_strided_slice %160 {offsets = [0, 0, 0], sizes = [1, 1, 8], strides = [1, 1, 1]} : vector<4x8x8xf32> to vector<1x1x8xf32>
    %162 = vector.shape_cast %161 : vector<1x1x8xf32> to vector<1x8xf32>
    %163 = vector.extract_strided_slice %160 {offsets = [0, 1, 0], sizes = [1, 1, 8], strides = [1, 1, 1]} : vector<4x8x8xf32> to vector<1x1x8xf32>
    %164 = vector.shape_cast %163 : vector<1x1x8xf32> to vector<1x8xf32>
    %165 = vector.extract_strided_slice %160 {offsets = [0, 2, 0], sizes = [1, 1, 8], strides = [1, 1, 1]} : vector<4x8x8xf32> to vector<1x1x8xf32>
    %166 = vector.shape_cast %165 : vector<1x1x8xf32> to vector<1x8xf32>
    %167 = vector.extract_strided_slice %160 {offsets = [0, 3, 0], sizes = [1, 1, 8], strides = [1, 1, 1]} : vector<4x8x8xf32> to vector<1x1x8xf32>
    %168 = vector.shape_cast %167 : vector<1x1x8xf32> to vector<1x8xf32>
    %169 = vector.extract_strided_slice %160 {offsets = [0, 4, 0], sizes = [1, 1, 8], strides = [1, 1, 1]} : vector<4x8x8xf32> to vector<1x1x8xf32>
    %170 = vector.shape_cast %169 : vector<1x1x8xf32> to vector<1x8xf32>
    %171 = vector.extract_strided_slice %160 {offsets = [0, 5, 0], sizes = [1, 1, 8], strides = [1, 1, 1]} : vector<4x8x8xf32> to vector<1x1x8xf32>
    %172 = vector.shape_cast %171 : vector<1x1x8xf32> to vector<1x8xf32>
    %173 = vector.extract_strided_slice %160 {offsets = [0, 6, 0], sizes = [1, 1, 8], strides = [1, 1, 1]} : vector<4x8x8xf32> to vector<1x1x8xf32>
    %174 = vector.shape_cast %173 : vector<1x1x8xf32> to vector<1x8xf32>
    %175 = vector.extract_strided_slice %160 {offsets = [0, 7, 0], sizes = [1, 1, 8], strides = [1, 1, 1]} : vector<4x8x8xf32> to vector<1x1x8xf32>
    %176 = vector.shape_cast %175 : vector<1x1x8xf32> to vector<1x8xf32>
    %177 = vector.extract_strided_slice %160 {offsets = [1, 0, 0], sizes = [1, 1, 8], strides = [1, 1, 1]} : vector<4x8x8xf32> to vector<1x1x8xf32>
    %178 = vector.shape_cast %177 : vector<1x1x8xf32> to vector<1x8xf32>
    %179 = vector.extract_strided_slice %160 {offsets = [1, 1, 0], sizes = [1, 1, 8], strides = [1, 1, 1]} : vector<4x8x8xf32> to vector<1x1x8xf32>
    %180 = vector.shape_cast %179 : vector<1x1x8xf32> to vector<1x8xf32>
    %181 = vector.extract_strided_slice %160 {offsets = [1, 2, 0], sizes = [1, 1, 8], strides = [1, 1, 1]} : vector<4x8x8xf32> to vector<1x1x8xf32>
    %182 = vector.shape_cast %181 : vector<1x1x8xf32> to vector<1x8xf32>
    %183 = vector.extract_strided_slice %160 {offsets = [1, 3, 0], sizes = [1, 1, 8], strides = [1, 1, 1]} : vector<4x8x8xf32> to vector<1x1x8xf32>
    %184 = vector.shape_cast %183 : vector<1x1x8xf32> to vector<1x8xf32>
    %185 = vector.extract_strided_slice %160 {offsets = [1, 4, 0], sizes = [1, 1, 8], strides = [1, 1, 1]} : vector<4x8x8xf32> to vector<1x1x8xf32>
    %186 = vector.shape_cast %185 : vector<1x1x8xf32> to vector<1x8xf32>
    %187 = vector.extract_strided_slice %160 {offsets = [1, 5, 0], sizes = [1, 1, 8], strides = [1, 1, 1]} : vector<4x8x8xf32> to vector<1x1x8xf32>
    %188 = vector.shape_cast %187 : vector<1x1x8xf32> to vector<1x8xf32>
    %189 = vector.extract_strided_slice %160 {offsets = [1, 6, 0], sizes = [1, 1, 8], strides = [1, 1, 1]} : vector<4x8x8xf32> to vector<1x1x8xf32>
    %190 = vector.shape_cast %189 : vector<1x1x8xf32> to vector<1x8xf32>
    %191 = vector.extract_strided_slice %160 {offsets = [1, 7, 0], sizes = [1, 1, 8], strides = [1, 1, 1]} : vector<4x8x8xf32> to vector<1x1x8xf32>
    %192 = vector.shape_cast %191 : vector<1x1x8xf32> to vector<1x8xf32>
    %193 = vector.extract_strided_slice %160 {offsets = [2, 0, 0], sizes = [1, 1, 8], strides = [1, 1, 1]} : vector<4x8x8xf32> to vector<1x1x8xf32>
    %194 = vector.shape_cast %193 : vector<1x1x8xf32> to vector<1x8xf32>
    %195 = vector.extract_strided_slice %160 {offsets = [2, 1, 0], sizes = [1, 1, 8], strides = [1, 1, 1]} : vector<4x8x8xf32> to vector<1x1x8xf32>
    %196 = vector.shape_cast %195 : vector<1x1x8xf32> to vector<1x8xf32>
    %197 = vector.extract_strided_slice %160 {offsets = [2, 2, 0], sizes = [1, 1, 8], strides = [1, 1, 1]} : vector<4x8x8xf32> to vector<1x1x8xf32>
    %198 = vector.shape_cast %197 : vector<1x1x8xf32> to vector<1x8xf32>
    %199 = vector.extract_strided_slice %160 {offsets = [2, 3, 0], sizes = [1, 1, 8], strides = [1, 1, 1]} : vector<4x8x8xf32> to vector<1x1x8xf32>
    %200 = vector.shape_cast %199 : vector<1x1x8xf32> to vector<1x8xf32>
    %201 = vector.extract_strided_slice %160 {offsets = [2, 4, 0], sizes = [1, 1, 8], strides = [1, 1, 1]} : vector<4x8x8xf32> to vector<1x1x8xf32>
    %202 = vector.shape_cast %201 : vector<1x1x8xf32> to vector<1x8xf32>
    %203 = vector.extract_strided_slice %160 {offsets = [2, 5, 0], sizes = [1, 1, 8], strides = [1, 1, 1]} : vector<4x8x8xf32> to vector<1x1x8xf32>
    %204 = vector.shape_cast %203 : vector<1x1x8xf32> to vector<1x8xf32>
    %205 = vector.extract_strided_slice %160 {offsets = [2, 6, 0], sizes = [1, 1, 8], strides = [1, 1, 1]} : vector<4x8x8xf32> to vector<1x1x8xf32>
    %206 = vector.shape_cast %205 : vector<1x1x8xf32> to vector<1x8xf32>
    %207 = vector.extract_strided_slice %160 {offsets = [2, 7, 0], sizes = [1, 1, 8], strides = [1, 1, 1]} : vector<4x8x8xf32> to vector<1x1x8xf32>
    %208 = vector.shape_cast %207 : vector<1x1x8xf32> to vector<1x8xf32>
    %209 = vector.extract_strided_slice %160 {offsets = [3, 0, 0], sizes = [1, 1, 8], strides = [1, 1, 1]} : vector<4x8x8xf32> to vector<1x1x8xf32>
    %210 = vector.shape_cast %209 : vector<1x1x8xf32> to vector<1x8xf32>
    %211 = vector.extract_strided_slice %160 {offsets = [3, 1, 0], sizes = [1, 1, 8], strides = [1, 1, 1]} : vector<4x8x8xf32> to vector<1x1x8xf32>
    %212 = vector.shape_cast %211 : vector<1x1x8xf32> to vector<1x8xf32>
    %213 = vector.extract_strided_slice %160 {offsets = [3, 2, 0], sizes = [1, 1, 8], strides = [1, 1, 1]} : vector<4x8x8xf32> to vector<1x1x8xf32>
    %214 = vector.shape_cast %213 : vector<1x1x8xf32> to vector<1x8xf32>
    %215 = vector.extract_strided_slice %160 {offsets = [3, 3, 0], sizes = [1, 1, 8], strides = [1, 1, 1]} : vector<4x8x8xf32> to vector<1x1x8xf32>
    %216 = vector.shape_cast %215 : vector<1x1x8xf32> to vector<1x8xf32>
    %217 = vector.extract_strided_slice %160 {offsets = [3, 4, 0], sizes = [1, 1, 8], strides = [1, 1, 1]} : vector<4x8x8xf32> to vector<1x1x8xf32>
    %218 = vector.shape_cast %217 : vector<1x1x8xf32> to vector<1x8xf32>
    %219 = vector.extract_strided_slice %160 {offsets = [3, 5, 0], sizes = [1, 1, 8], strides = [1, 1, 1]} : vector<4x8x8xf32> to vector<1x1x8xf32>
    %220 = vector.shape_cast %219 : vector<1x1x8xf32> to vector<1x8xf32>
    %221 = vector.extract_strided_slice %160 {offsets = [3, 6, 0], sizes = [1, 1, 8], strides = [1, 1, 1]} : vector<4x8x8xf32> to vector<1x1x8xf32>
    %222 = vector.shape_cast %221 : vector<1x1x8xf32> to vector<1x8xf32>
    %223 = vector.extract_strided_slice %160 {offsets = [3, 7, 0], sizes = [1, 1, 8], strides = [1, 1, 1]} : vector<4x8x8xf32> to vector<1x1x8xf32>
    %224 = vector.shape_cast %223 : vector<1x1x8xf32> to vector<1x8xf32>
    %225 = tpu.concatenate %162, %164, %166, %168, %170, %172, %174, %176, %178, %180, %182, %184, %186, %188, %190, %192 in 1 : vector<1x8xf32>, vector<1x8xf32>, vector<1x8xf32>, vector<1x8xf32>, vector<1x8xf32>, vector<1x8xf32>, vector<1x8xf32>, vector<1x8xf32>, vector<1x8xf32>, vector<1x8xf32>, vector<1x8xf32>, vector<1x8xf32>, vector<1x8xf32>, vector<1x8xf32>, vector<1x8xf32>, vector<1x8xf32> -> vector<1x128xf32>
    %226 = tpu.concatenate %194, %196, %198, %200, %202, %204, %206, %208, %210, %212, %214, %216, %218, %220, %222, %224 in 1 : vector<1x8xf32>, vector<1x8xf32>, vector<1x8xf32>, vector<1x8xf32>, vector<1x8xf32>, vector<1x8xf32>, vector<1x8xf32>, vector<1x8xf32>, vector<1x8xf32>, vector<1x8xf32>, vector<1x8xf32>, vector<1x8xf32>, vector<1x8xf32>, vector<1x8xf32>, vector<1x8xf32>, vector<1x8xf32> -> vector<1x128xf32>
    %227 = tpu.concatenate %225, %226 in 1 : vector<1x128xf32>, vector<1x128xf32> -> vector<1x256xf32>
    %c0_96 = arith.constant 0 : index
    %c0_97 = arith.constant 0 : index
    %c0_98 = arith.constant 0 : index
    %228 = vector.load %arg9[%c0_96, %c0_97, %c0_98] : memref<1x1x256xf32, #tpu.memory_space<vmem>>, vector<1x1x256xf32>
    %229 = vector.shape_cast %228 : vector<1x1x256xf32> to vector<1x256xf32>
    %230 = vector.shape_cast %227 : vector<1x256xf32> to vector<1x1x256xf32>
    tpu.vector_store %arg9[%c0_96, %c0_97, %c0_98], %230 {strides = array<i32>} : memref<1x1x256xf32, #tpu.memory_space<vmem>>, vector<1x1x256xf32>,
    %231 = arith.truncf %160 : vector<4x8x8xf32> to vector<4x8x8xbf16>
    "tpu.trace_start"() <{level = 10 : i32, message = "hqk,hkd->hqd"}> : () -> ()
    %cst_99 = arith.constant dense<0.000000e+00> : vector<4x8x8xf32>
    %232 = tpu.matmul %231, %146, %cst_99 {dimension_numbers = #tpu.dot_dimension_numbers<[2], [1], [1], [2], [0, 0, 0, 1, 1, 2], [0], [0]>} : vector<4x8x8xbf16>, vector<4x8x8xbf16>, vector<4x8x8xf32> -> vector<4x8x8xf32>
    "tpu.trace_stop"() : () -> ()
    %233 = vector.extract_strided_slice %232 {offsets = [0, 0, 0], sizes = [1, 8, 8], strides = [1, 1, 1]} : vector<4x8x8xf32> to vector<1x8x8xf32>
    %234 = vector.shape_cast %233 : vector<1x8x8xf32> to vector<8x8xf32>
    %235 = vector.extract_strided_slice %232 {offsets = [1, 0, 0], sizes = [1, 8, 8], strides = [1, 1, 1]} : vector<4x8x8xf32> to vector<1x8x8xf32>
    %236 = vector.shape_cast %235 : vector<1x8x8xf32> to vector<8x8xf32>
    %237 = vector.extract_strided_slice %232 {offsets = [2, 0, 0], sizes = [1, 8, 8], strides = [1, 1, 1]} : vector<4x8x8xf32> to vector<1x8x8xf32>
    %238 = vector.shape_cast %237 : vector<1x8x8xf32> to vector<8x8xf32>
    %239 = vector.extract_strided_slice %232 {offsets = [3, 0, 0], sizes = [1, 8, 8], strides = [1, 1, 1]} : vector<4x8x8xf32> to vector<1x8x8xf32>
    %240 = vector.shape_cast %239 : vector<1x8x8xf32> to vector<8x8xf32>
    %241 = tpu.concatenate %234, %236, %238, %240 in 1 : vector<8x8xf32>, vector<8x8xf32>, vector<8x8xf32>, vector<8x8xf32> -> vector<8x32xf32>
    %242 = arith.truncf %241 : vector<8x32xf32> to vector<8x32xbf16>
    %c3_100 = arith.constant 3 : index
    %c0_101 = arith.constant 0 : index
    %c0_102 = arith.constant 0 : index
    %243 = vector.load %arg5[%c3_100, %c0_101, %c0_102] : memref<4x32x32xf32, #tpu.memory_space<vmem>>, vector<1x32x32xf32>
    %244 = vector.shape_cast %243 : vector<1x32x32xf32> to vector<32x32xf32>
    %245 = arith.truncf %244 : vector<32x32xf32> to vector<32x32xbf16>
    %cst_103 = arith.constant dense<0.000000e+00> : vector<8x32xf32>
    %246 = tpu.matmul %242, %245, %cst_103 {dimension_numbers = #tpu.dot_dimension_numbers<[1], [1], [0], [0], [0, 0, 1, 0], [], []>} : vector<8x32xbf16>, vector<32x32xbf16>, vector<8x32xf32> -> vector<8x32xf32>
    %c0_104 = arith.constant 0 : index
    %c0_105 = arith.constant 0 : index
    %247 = vector.load %arg7[%c0_104, %c0_105] : memref<1x32xf32, #tpu.memory_space<vmem>>, vector<1x32xf32>
    %248 = vector.broadcast %247 : vector<1x32xf32> to vector<8x32xf32>
    %249 = arith.addf %246, %248 : vector<8x32xf32>
    %250 = vector.extract_strided_slice %249 {offsets = [0, 0], sizes = [1, 32], strides = [1, 1]} : vector<8x32xf32> to vector<1x32xf32>
    %251 = vector.extract_strided_slice %249 {offsets = [1, 0], sizes = [1, 32], strides = [1, 1]} : vector<8x32xf32> to vector<1x32xf32>
    %252 = vector.extract_strided_slice %249 {offsets = [2, 0], sizes = [1, 32], strides = [1, 1]} : vector<8x32xf32> to vector<1x32xf32>
    %253 = vector.extract_strided_slice %249 {offsets = [3, 0], sizes = [1, 32], strides = [1, 1]} : vector<8x32xf32> to vector<1x32xf32>
    %254 = vector.extract_strided_slice %249 {offsets = [4, 0], sizes = [1, 32], strides = [1, 1]} : vector<8x32xf32> to vector<1x32xf32>
    %255 = vector.extract_strided_slice %249 {offsets = [5, 0], sizes = [1, 32], strides = [1, 1]} : vector<8x32xf32> to vector<1x32xf32>
    %256 = vector.extract_strided_slice %249 {offsets = [6, 0], sizes = [1, 32], strides = [1, 1]} : vector<8x32xf32> to vector<1x32xf32>
    %257 = vector.extract_strided_slice %249 {offsets = [7, 0], sizes = [1, 32], strides = [1, 1]} : vector<8x32xf32> to vector<1x32xf32>
    %258 = tpu.concatenate %250, %251, %252, %253, %254, %255, %256, %257 in 1 : vector<1x32xf32>, vector<1x32xf32>, vector<1x32xf32>, vector<1x32xf32>, vector<1x32xf32>, vector<1x32xf32>, vector<1x32xf32>, vector<1x32xf32> -> vector<1x256xf32>
    %c0_106 = arith.constant 0 : index
    %c0_107 = arith.constant 0 : index
    %c0_108 = arith.constant 0 : index
    %259 = vector.load %arg8[%c0_106, %c0_107, %c0_108] : memref<1x1x256xf32, #tpu.memory_space<vmem>>, vector<1x1x256xf32>
    %260 = vector.shape_cast %259 : vector<1x1x256xf32> to vector<1x256xf32>
    %261 = vector.shape_cast %258 : vector<1x256xf32> to vector<1x1x256xf32>
    tpu.vector_store %arg8[%c0_106, %c0_107, %c0_108], %261 {strides = array<i32>} : memref<1x1x256xf32, #tpu.memory_space<vmem>>, vector<1x1x256xf32>,
    return
  }
  func.func @transform_0(%arg0: i32) -> (i32, i32, i32) {
    %c0_i32 = arith.constant 0 : i32
    %c0_i32_0 = arith.constant 0 : i32
    %c0_i32_1 = arith.constant 0 : i32
    return %arg0, %c0_i32, %c0_i32_0 : i32, i32, i32
  }
  func.func @transform_1(%arg0: i32) -> (i32, i32, i32) {
    %c0_i32 = arith.constant 0 : i32
    %c0_i32_0 = arith.constant 0 : i32
    %c0_i32_1 = arith.constant 0 : i32
    return %arg0, %c0_i32, %c0_i32_0 : i32, i32, i32
  }
  func.func @transform_2(%arg0: i32) -> (i32, i32, i32) {
    %c0_i32 = arith.constant 0 : i32
    %c0_i32_0 = arith.constant 0 : i32
    %c0_i32_1 = arith.constant 0 : i32
    return %arg0, %c0_i32, %c0_i32_0 : i32, i32, i32
  }
  func.func @transform_3(%arg0: i32) -> (i32, i32, i32) {
    %c0_i32 = arith.constant 0 : i32
    %c0_i32_0 = arith.constant 0 : i32
    %c0_i32_1 = arith.constant 0 : i32
    %c0_i32_2 = arith.constant 0 : i32
    return %c0_i32, %c0_i32_0, %c0_i32_1 : i32, i32, i32
  }
  func.func @transform_4(%arg0: i32) -> (i32, i32, i32) {
    %c0_i32 = arith.constant 0 : i32
    %c0_i32_0 = arith.constant 0 : i32
    %c0_i32_1 = arith.constant 0 : i32
    %c0_i32_2 = arith.constant 0 : i32
    return %c0_i32, %c0_i32_0, %c0_i32_1 : i32, i32, i32
  }
  func.func @transform_5(%arg0: i32) -> (i32, i32, i32) {
    %c0_i32 = arith.constant 0 : i32
    %c0_i32_0 = arith.constant 0 : i32
    %c0_i32_1 = arith.constant 0 : i32
    %c0_i32_2 = arith.constant 0 : i32
    return %c0_i32, %c0_i32_0, %c0_i32_1 : i32, i32, i32
  }
  func.func @transform_6(%arg0: i32) -> (i32, i32) {
    %c0_i32 = arith.constant 0 : i32
    %c0_i32_0 = arith.constant 0 : i32
    %c0_i32_1 = arith.constant 0 : i32
    return %c0_i32, %c0_i32_0 : i32, i32
  }
  func.func @transform_7(%arg0: i32) -> (i32, i32, i32) {
    %c0_i32 = arith.constant 0 : i32
    %c0_i32_0 = arith.constant 0 : i32
    %c0_i32_1 = arith.constant 0 : i32
    return %arg0, %c0_i32, %c0_i32_0 : i32, i32, i32
  }
  func.func @transform_8(%arg0: i32) -> (i32, i32, i32) {
    %c0_i32 = arith.constant 0 : i32
    %c0_i32_0 = arith.constant 0 : i32
    %c0_i32_1 = arith.constant 0 : i32
    return %arg0, %c0_i32, %c0_i32_0 : i32, i32, i32
  }
}

</mosaic_0001>

<llo_original>
// kernel: _mha_forward_impl.1
$region0: #{_mha_forward_impl.1}
  #allocation0 [shape = 'u32[]', space=smem, size = 0x4, offset = 0x4, fixed_abs, tag = 'smem constant byte address 0x4 - core index']
  #allocation1 [shape = 'u32[144,128]{1,0:T(1,128)}', space=vmem, size = 0x12000, scoped, tag = 'internal scratch']
  %s0 = inlined_call_operand.vmem [shape: f32[2,8,32], index: 0, kind: input, shape index: {}]
  %s1 = inlined_call_operand.vmem [shape: f32[2,8,32], index: 1, kind: input, shape index: {}]
  %s2 = inlined_call_operand.vmem [shape: f32[2,8,32], index: 2, kind: input, shape index: {}]
  %s3 = inlined_call_operand.vmem [shape: f32[1,8,8], index: 3, kind: input, shape index: {}]
  %s4 = inlined_call_operand.vmem [shape: f32[4,32,32], index: 4, kind: input, shape index: {}]
  %s5 = inlined_call_operand.vmem [shape: f32[3,4,8], index: 5, kind: input, shape index: {}]
  %s6 = inlined_call_operand.vmem [shape: f32[1,32], index: 6, kind: input, shape index: {}]
  %s7 = inlined_call_operand.vmem [shape: f32[2,1,256], index: 7, kind: output, shape index: {0}]
  %s8 = inlined_call_operand.vmem [shape: f32[2,1,256], index: 8, kind: output, shape index: {1}]
  %9 = xla_tuple %s7, %s8
  %s10 = sld [smem:[#allocation0]]
  $region69: #{_mha_forward_impl.1} parent=0
    _
  %s12 = ssub.s32 1, %s10
  %s13 = scalar_select 0, %s12, %s10
  loop: start=0, step=1, limit=4
  $region2: #{_mha_forward_impl.1} parent=0 // loop_pre_header
    _
  $region3: #{_mha_forward_impl.1} parent=0 // loop_header
    %s15 = sphi 0, %s19
    %p16 = scmp.ge.s32.totalorder %s15, 4
    %s25 = sphi 0, %s27
    %s28 = sphi 0, %s25
    %s29 = sphi 0, %s28
    %s45 = sphi 0, %s29
    %s51 = sphi 0, %s53
    %s54 = sphi 0, %s51
    %s55 = sphi 0, %s54
    %s71 = sphi 0, %s55
    %s77 = sphi 0, %s79
    %s80 = sphi 0, %s77
    %s81 = sphi 0, %s80
    %s97 = sphi 0, %s81
    %s101 = sphi 0, %s101
    %s103 = sphi 0, %s101
    %s104 = sphi 0, %s103
    %s118 = sphi 0, %s104
    %s122 = sphi 0, %s122
    %s124 = sphi 0, %s122
    %s125 = sphi 0, %s124
    %s139 = sphi 0, %s125
    %s143 = sphi 0, %s143
    %s145 = sphi 0, %s143
    %s146 = sphi 0, %s145
    %s160 = sphi 0, %s146
    %s164 = sphi 0, %s164
    %s166 = sphi 0, %s164
    %s167 = sphi 0, %s166
    %s181 = sphi 0, %s167
    %s187 = sphi 0, %s189
    %s190 = sphi 0, %s187
    %s191 = sphi 0, %s190
    %s207 = sphi 0, %s191
    %s213 = sphi 0, %s215
    %s216 = sphi 0, %s213
    %s217 = sphi 0, %s216
    %s233 = sphi 0, %s217
  $region4: #{_mha_forward_impl.1} parent=0 // loop_header_branch
    %18 = sbr.rel (%p16) target = $region8
  $region5: #{_mha_forward_impl.1} parent=0 // loop_body
    %s20 = ssub.s32 %s15, 1
    %s21 = ssub.s32 %s15, 2
    %s22 = sadd.s32 %s15, 1
    %s23 = ssub.s32 %s15, %s22
    %p24 = scmp.eq.s32.totalorder %s23, 0
    %s26 = sadd.s32 %s25, 1
    %s27 = scalar_select %p24, %s25, %s26
    %p30 = pneg %p24
    %p31 = scmp.eq.s32.totalorder %s15, 1
    %p32 = por %p30, %p31
    %p33 = scmp.ne.s32.totalorder %s25, %s28
    %p34 = scmp.eq.s32.totalorder %s15, 0
    %p35 = por %p33, %p34
    %p36 = scmp.ne.s32.totalorder %s25, %s28
    %p37 = scmp.eq.s32.totalorder %s20, 1
    %p38 = por %p36, %p37
    %p39 = scmp.ne.s32.totalorder %s28, %s29
    %p40 = scmp.eq.s32.totalorder %s20, 0
    %p41 = por %p39, %p40
    %p42 = scmp.ne.s32.totalorder %s28, %s29
    %p43 = scmp.eq.s32.totalorder %s21, 1
    %p44 = por %p42, %p43
    %p46 = scmp.ne.s32.totalorder %s29, %s45
    %p47 = scmp.eq.s32.totalorder %s21, 0
    %p48 = por %p46, %p47
    %s49 = ssub.s32 %s15, %s22
    %p50 = scmp.eq.s32.totalorder %s49, 0
    %s52 = sadd.s32 %s51, 1
    %s53 = scalar_select %p50, %s51, %s52
    %p56 = pneg %p50
    %p57 = scmp.eq.s32.totalorder %s15, 1
    %p58 = por %p56, %p57
    %p59 = scmp.ne.s32.totalorder %s51, %s54
    %p60 = scmp.eq.s32.totalorder %s15, 0
    %p61 = por %p59, %p60
    %p62 = scmp.ne.s32.totalorder %s51, %s54
    %p63 = scmp.eq.s32.totalorder %s20, 1
    %p64 = por %p62, %p63
    %p65 = scmp.ne.s32.totalorder %s54, %s55
    %p66 = scmp.eq.s32.totalorder %s20, 0
    %p67 = por %p65, %p66
    %p68 = scmp.ne.s32.totalorder %s54, %s55
    %p69 = scmp.eq.s32.totalorder %s21, 1
    %p70 = por %p68, %p69
    %p72 = scmp.ne.s32.totalorder %s55, %s71
    %p73 = scmp.eq.s32.totalorder %s21, 0
    %p74 = por %p72, %p73
    %s75 = ssub.s32 %s15, %s22
    %p76 = scmp.eq.s32.totalorder %s75, 0
    %s78 = sadd.s32 %s77, 1
    %s79 = scalar_select %p76, %s77, %s78
    %p82 = pneg %p76
    %p83 = scmp.eq.s32.totalorder %s15, 1
    %p84 = por %p82, %p83
    %p85 = scmp.ne.s32.totalorder %s77, %s80
    %p86 = scmp.eq.s32.totalorder %s15, 0
    %p87 = por %p85, %p86
    %p88 = scmp.ne.s32.totalorder %s77, %s80
    %p89 = scmp.eq.s32.totalorder %s20, 1
    %p90 = por %p88, %p89
    %p91 = scmp.ne.s32.totalorder %s80, %s81
    %p92 = scmp.eq.s32.totalorder %s20, 0
    %p93 = por %p91, %p92
    %p94 = scmp.ne.s32.totalorder %s80, %s81
    %p95 = scmp.eq.s32.totalorder %s21, 1
    %p96 = por %p94, %p95
    %p98 = scmp.ne.s32.totalorder %s81, %s97
    %p99 = scmp.eq.s32.totalorder %s21, 0
    %p100 = por %p98, %p99
    %s102 = sadd.s32 %s101, 1
    %p105 = scmp.eq.s32.totalorder %s15, 1
    %p106 = scmp.ne.s32.totalorder %s101, %s103
    %p107 = scmp.eq.s32.totalorder %s15, 0
    %p108 = por %p106, %p107
    %p109 = scmp.ne.s32.totalorder %s101, %s103
    %p110 = scmp.eq.s32.totalorder %s20, 1
    %p111 = por %p109, %p110
    %p112 = scmp.ne.s32.totalorder %s103, %s104
    %p113 = scmp.eq.s32.totalorder %s20, 0
    %p114 = por %p112, %p113
    %p115 = scmp.ne.s32.totalorder %s103, %s104
    %p116 = scmp.eq.s32.totalorder %s21, 1
    %p117 = por %p115, %p116
    %p119 = scmp.ne.s32.totalorder %s104, %s118
    %p120 = scmp.eq.s32.totalorder %s21, 0
    %p121 = por %p119, %p120
    %s123 = sadd.s32 %s122, 1
    %p126 = scmp.eq.s32.totalorder %s15, 1
    %p127 = scmp.ne.s32.totalorder %s122, %s124
    %p128 = scmp.eq.s32.totalorder %s15, 0
    %p129 = por %p127, %p128
    %p130 = scmp.ne.s32.totalorder %s122, %s124
    %p131 = scmp.eq.s32.totalorder %s20, 1
    %p132 = por %p130, %p131
    %p133 = scmp.ne.s32.totalorder %s124, %s125
    %p134 = scmp.eq.s32.totalorder %s20, 0
    %p135 = por %p133, %p134
    %p136 = scmp.ne.s32.totalorder %s124, %s125
    %p137 = scmp.eq.s32.totalorder %s21, 1
    %p138 = por %p136, %p137
    %p140 = scmp.ne.s32.totalorder %s125, %s139
    %p141 = scmp.eq.s32.totalorder %s21, 0
    %p142 = por %p140, %p141
    %s144 = sadd.s32 %s143, 1
    %p147 = scmp.eq.s32.totalorder %s15, 1
    %p148 = scmp.ne.s32.totalorder %s143, %s145
    %p149 = scmp.eq.s32.totalorder %s15, 0
    %p150 = por %p148, %p149
    %p151 = scmp.ne.s32.totalorder %s143, %s145
    %p152 = scmp.eq.s32.totalorder %s20, 1
    %p153 = por %p151, %p152
    %p154 = scmp.ne.s32.totalorder %s145, %s146
    %p155 = scmp.eq.s32.totalorder %s20, 0
    %p156 = por %p154, %p155
    %p157 = scmp.ne.s32.totalorder %s145, %s146
    %p158 = scmp.eq.s32.totalorder %s21, 1
    %p159 = por %p157, %p158
    %p161 = scmp.ne.s32.totalorder %s146, %s160
    %p162 = scmp.eq.s32.totalorder %s21, 0
    %p163 = por %p161, %p162
    %s165 = sadd.s32 %s164, 1
    %p168 = scmp.eq.s32.totalorder %s15, 1
    %p169 = scmp.ne.s32.totalorder %s164, %s166
    %p170 = scmp.eq.s32.totalorder %s15, 0
    %p171 = por %p169, %p170
    %p172 = scmp.ne.s32.totalorder %s164, %s166
    %p173 = scmp.eq.s32.totalorder %s20, 1
    %p174 = por %p172, %p173
    %p175 = scmp.ne.s32.totalorder %s166, %s167
    %p176 = scmp.eq.s32.totalorder %s20, 0
    %p177 = por %p175, %p176
    %p178 = scmp.ne.s32.totalorder %s166, %s167
    %p179 = scmp.eq.s32.totalorder %s21, 1
    %p180 = por %p178, %p179
    %p182 = scmp.ne.s32.totalorder %s167, %s181
    %p183 = scmp.eq.s32.totalorder %s21, 0
    %p184 = por %p182, %p183
    %s185 = ssub.s32 %s15, %s22
    %p186 = scmp.eq.s32.totalorder %s185, 0
    %s188 = sadd.s32 %s187, 1
    %s189 = scalar_select %p186, %s187, %s188
    %p192 = pneg %p186
    %p193 = scmp.eq.s32.totalorder %s15, 1
    %p194 = por %p192, %p193
    %p195 = scmp.ne.s32.totalorder %s187, %s190
    %p196 = scmp.eq.s32.totalorder %s15, 0
    %p197 = por %p195, %p196
    %p198 = scmp.ne.s32.totalorder %s187, %s190
    %p199 = scmp.eq.s32.totalorder %s20, 1
    %p200 = por %p198, %p199
    %p201 = scmp.ne.s32.totalorder %s190, %s191
    %p202 = scmp.eq.s32.totalorder %s20, 0
    %p203 = por %p201, %p202
    %p204 = scmp.ne.s32.totalorder %s190, %s191
    %p205 = scmp.eq.s32.totalorder %s21, 1
    %p206 = por %p204, %p205
    %p208 = scmp.ne.s32.totalorder %s191, %s207
    %p209 = scmp.eq.s32.totalorder %s21, 0
    %p210 = por %p208, %p209
    %s211 = ssub.s32 %s15, %s22
    %p212 = scmp.eq.s32.totalorder %s211, 0
    %s214 = sadd.s32 %s213, 1
    %s215 = scalar_select %p212, %s213, %s214
    %p218 = pneg %p212
    %p219 = scmp.eq.s32.totalorder %s15, 1
    %p220 = por %p218, %p219
    %p221 = scmp.ne.s32.totalorder %s213, %s216
    %p222 = scmp.eq.s32.totalorder %s15, 0
    %p223 = por %p221, %p222
    %p224 = scmp.ne.s32.totalorder %s213, %s216
    %p225 = scmp.eq.s32.totalorder %s20, 1
    %p226 = por %p224, %p225
    %p227 = scmp.ne.s32.totalorder %s216, %s217
    %p228 = scmp.eq.s32.totalorder %s20, 0
    %p229 = por %p227, %p228
    %p230 = scmp.ne.s32.totalorder %s216, %s217
    %p231 = scmp.eq.s32.totalorder %s21, 1
    %p232 = por %p230, %p231
    %p234 = scmp.ne.s32.totalorder %s217, %s233
    %p235 = scmp.eq.s32.totalorder %s21, 0
    %p236 = por %p234, %p235
    %p237 = scmp.le.s32.totalorder 1, %s15
    %p238 = scmp.lt.s32.totalorder %s15, 3
    %p239 = pnand %p237, %p238
    %p240 = pneg %p239
    // Predicated region
    $region9: #{_mha_forward_impl.1} parent=5 // pred_check
      _
    $region10: #{_mha_forward_impl.1} parent=5 // pred_check_branch
      %242 = sbr.rel (%p239) target = $region12
    $region11: #{_mha_forward_impl.1} parent=5 // pred_region
      %s243 = ssub.s32 %s15, 1
      // Predicated region
      $region13: #{_mha_forward_impl.1} parent=11 // pred_check
        %p244 = pneg %p114
      $region14: #{_mha_forward_impl.1} parent=11 // pred_check_branch
        %246 = sbr.rel (%p244) target = $region16
      $region15: #{_mha_forward_impl.1} parent=11 // pred_region
        _
      $region16: #{_mha_forward_impl.1} parent=11 // pred_fallthru
        _
      // Predicated region
      $region17: #{_mha_forward_impl.1} parent=11 // pred_check
        %p247 = pneg %p135
      $region18: #{_mha_forward_impl.1} parent=11 // pred_check_branch
        %249 = sbr.rel (%p247) target = $region20
      $region19: #{_mha_forward_impl.1} parent=11 // pred_region
        _
      $region20: #{_mha_forward_impl.1} parent=11 // pred_fallthru
        _
      // Predicated region
      $region21: #{_mha_forward_impl.1} parent=11 // pred_check
        %p250 = pneg %p156
      $region22: #{_mha_forward_impl.1} parent=11 // pred_check_branch
        %252 = sbr.rel (%p250) target = $region24
      $region23: #{_mha_forward_impl.1} parent=11 // pred_region
        _
      $region24: #{_mha_forward_impl.1} parent=11 // pred_fallthru
        _
      // Predicated region
      $region25: #{_mha_forward_impl.1} parent=11 // pred_check
        %p253 = pneg %p177
      $region26: #{_mha_forward_impl.1} parent=11 // pred_check_branch
        %255 = sbr.rel (%p253) target = $region28
      $region27: #{_mha_forward_impl.1} parent=11 // pred_region
        _
      $region28: #{_mha_forward_impl.1} parent=11 // pred_fallthru
        _
    $region12: #{_mha_forward_impl.1} parent=5 // pred_fallthru
      _
    %p256 = scmp.lt.s32.totalorder %s15, 2
    // Predicated region
    $region29: #{_mha_forward_impl.1} parent=5 // pred_check
      %p257 = pneg %p256
    $region30: #{_mha_forward_impl.1} parent=5 // pred_check_branch
      %259 = sbr.rel (%p257) target = $region32
    $region31: #{_mha_forward_impl.1} parent=5 // pred_region
      // Predicated region
      $region33: #{_mha_forward_impl.1} parent=31 // pred_check
        %p260 = pneg %p35
      $region34: #{_mha_forward_impl.1} parent=31 // pred_check_branch
        %262 = sbr.rel (%p260) target = $region36
      $region35: #{_mha_forward_impl.1} parent=31 // pred_region
        %p263 = scmp.lt.s32.totalorder %s15, 1
        %s264 = scalar_select %p263, %s15, 1
        %s265 = smul.addr %s264, 8
        %s266 = scalar_lea.vmem %s0, %s265
      $region36: #{_mha_forward_impl.1} parent=31 // pred_fallthru
        _
      // Predicated region
      $region37: #{_mha_forward_impl.1} parent=31 // pred_check
        %p267 = pneg %p61
      $region38: #{_mha_forward_impl.1} parent=31 // pred_check_branch
        %269 = sbr.rel (%p267) target = $region40
      $region39: #{_mha_forward_impl.1} parent=31 // pred_region
        %p270 = scmp.lt.s32.totalorder %s15, 1
        %s271 = scalar_select %p270, %s15, 1
        %s272 = smul.addr %s271, 8
        %s273 = scalar_lea.vmem %s1, %s272
      $region40: #{_mha_forward_impl.1} parent=31 // pred_fallthru
        _
      // Predicated region
      $region41: #{_mha_forward_impl.1} parent=31 // pred_check
        %p274 = pneg %p87
      $region42: #{_mha_forward_impl.1} parent=31 // pred_check_branch
        %276 = sbr.rel (%p274) target = $region44
      $region43: #{_mha_forward_impl.1} parent=31 // pred_region
        %p277 = scmp.lt.s32.totalorder %s15, 1
        %s278 = scalar_select %p277, %s15, 1
        %s279 = smul.addr %s278, 8
        %s280 = scalar_lea.vmem %s2, %s279
      $region44: #{_mha_forward_impl.1} parent=31 // pred_fallthru
        _
    $region32: #{_mha_forward_impl.1} parent=5 // pred_fallthru
      _
    %p281 = scmp.le.s32.totalorder 1, %s15
    %p282 = scmp.lt.s32.totalorder %s15, 3
    %p283 = pnand %p281, %p282
    %p284 = pneg %p283
    // Predicated region
    $region45: #{_mha_forward_impl.1} parent=5 // pred_check
      _
    $region46: #{_mha_forward_impl.1} parent=5 // pred_check_branch
      %286 = sbr.rel (%p283) target = $region48
    $region47: #{_mha_forward_impl.1} parent=5 // pred_region
      %s287 = ssub.s32 %s15, 1
      %p288 = scmp.lt.s32.totalorder %s20, 1
      %s289 = scalar_select %p288, %s20, 1
      %s290 = smul.addr %s289, 8
      %s291 = scalar_lea.vmem %s0, %s290
      %p292 = pneg %p41
      %p293 = pneg %p38
      %p294 = scmp.lt.s32.totalorder %s20, 1
      %s295 = scalar_select %p294, %s20, 1
      %s296 = smul.addr %s295, 8
      %s297 = scalar_lea.vmem %s1, %s296
      %p298 = pneg %p67
      %p299 = pneg %p64
      %p300 = scmp.lt.s32.totalorder %s20, 1
      %s301 = scalar_select %p300, %s20, 1
      %s302 = smul.addr %s301, 8
      %s303 = scalar_lea.vmem %s2, %s302
      %p304 = pneg %p93
      %p305 = pneg %p90
      %p306 = pneg %p114
      %p307 = pneg %p111
      %p308 = pneg %p135
      %p309 = pneg %p132
      %p310 = pneg %p156
      %p311 = pneg %p153
      %p312 = pneg %p177
      %p313 = pneg %p174
      %p314 = pneg %p203
      %p315 = pneg %p200
      %p316 = scmp.lt.s32.totalorder %s20, 1
      %s317 = scalar_select %p316, %s20, 1
      %s318 = smul.addr %s317, 2
      %s319 = scalar_lea.vmem %s7, %s318
      %p320 = pneg %p229
      %p321 = pneg %p226
      %p322 = scmp.lt.s32.totalorder %s20, 1
      %s323 = scalar_select %p322, %s20, 1
      %s324 = smul.addr %s323, 2
      %s325 = scalar_lea.vmem %s8, %s324
      %p326 = scmp.lt.s32.totalorder %s20, 1
      %s327 = scalar_select %p326, %s20, 1
      %s328 = smul.addr %s327, 8
      %s329 = scalar_lea.vmem %s0, %s328
      %p330 = scmp.lt.s32.totalorder %s20, 1
      %s331 = scalar_select %p330, %s20, 1
      %s332 = smul.addr %s331, 8
      %s333 = scalar_lea.vmem %s1, %s332
      %p334 = scmp.lt.s32.totalorder %s20, 1
      %s335 = scalar_select %p334, %s20, 1
      %s336 = smul.addr %s335, 8
      %s337 = scalar_lea.vmem %s2, %s336
      %p338 = scmp.lt.s32.totalorder %s20, 1
      %s339 = scalar_select %p338, %s20, 1
      %s340 = smul.addr %s339, 2
      %s341 = scalar_lea.vmem %s7, %s340
      %p342 = scmp.lt.s32.totalorder %s20, 1
      %s343 = scalar_select %p342, %s20, 1
      %s344 = smul.addr %s343, 2
      %s345 = scalar_lea.vmem %s8, %s344
      %v347 = vld [vmem:[%s329] sm:$0xff]
      %v348 = vpack.c.bf16 %v347, %v347
      %v349 = vld [vmem:[%s333] sm:$0xff]
      %v350 = vpack.c.bf16 %v349, %v349
      %v351 = vld [vmem:[%s337] sm:$0xff]
      %v352 = vpack.c.bf16 %v351, %v351
      %v353 = vld [vmem:[%s3] sm:$0xff]
      %v354 = vmul.f32 %v353, -1e+09
      %v355 = vld [vmem:[%s4] sm:$0xff]
      %v356 = vpack.c.bf16 %v355, %v355
      %s357 = scalar_lea.vmem %s4, 32
      %v358 = vld [vmem:[%s357] sm:$0xff]
      %v359 = vpack.c.bf16 %v358, %v358
      %s360 = scalar_lea.vmem %s4, 64
      %v361 = vld [vmem:[%s360] sm:$0xff]
      %v362 = vpack.c.bf16 %v361, %v361
      %v363 = vld [vmem:[%s5] sm:$0x1]
      %v364 = vlaneseq
      %v365 = vshrl.u32 %v364, 7
      %v366 = vsub.s32 0, %v365
      %v367 = vrot.slane %v363, %v366
      %vm368 = vcmask 261120
      %v370 = vsel %vm368, %v348, 0
      %v373 = vsel %vm368, %v356, 0
      %375 = vmatprep.subr.bf16.mxu0 0
      %376 = vmatpush1.bf16.xpose.msra.mxu0 0
      %377 = vmatprep.subr.bf16.mxu0 0
      %378 = vmatpush1.bf16.xpose.msra.mxu0 0
      %379 = vmatprep.subr.bf16.mxu0 0
      %380 = vmatpush1.bf16.xpose.msra.mxu0 0
      %381 = vmatprep.subr.bf16.mxu0 0
      %382 = vmatpush1.bf16.xpose.msra.mxu0 0
      %383 = vmatprep.subr.bf16.mxu0 0
      %384 = vmatpush1.bf16.xpose.msra.mxu0 0
      %385 = vmatprep.subr.bf16.mxu0 0
      %386 = vmatpush1.bf16.xpose.msra.mxu0 0
      %387 = vmatprep.subr.bf16.mxu0 0
      %388 = vmatpush1.bf16.xpose.msra.mxu0 0
      %389 = vmatprep.subr.bf16.mxu0 0
      %390 = vmatpush1.bf16.xpose.msra.mxu0 %v373
      %391 = vmatprep.subr.bf16.mxu0 0
      %392 = vmatpush2.bf16.xpose.msra.mxu0 0
      %393 = vmatprep.subr.bf16.mxu0 0
      %394 = vmatpush2.bf16.xpose.msra.mxu0 0
      %395 = vmatprep.subr.bf16.mxu0 0
      %396 = vmatpush2.bf16.xpose.msra.mxu0 0
      %397 = vmatprep.subr.bf16.mxu0 0
      %398 = vmatpush2.bf16.xpose.msra.mxu0 0
      %399 = vmatprep.subr.bf16.mxu0 0
      %400 = vmatpush2.bf16.xpose.msra.mxu0 0
      %401 = vmatprep.subr.bf16.mxu0 0
      %402 = vmatpush2.bf16.xpose.msra.mxu0 0
      %403 = vmatprep.subr.bf16.mxu0 0
      %404 = vmatpush2.bf16.xpose.msra.mxu0 0
      %405 = vmatprep.subr.bf16.mxu0 0
      %406 = vmatpush2.bf16.xpose.msra.mxu0 0
      %407 = vmatprep.mubr.bf16.mxu0 0
      %408 = vmatmul.mubr.bf16.gmra.mxu0 %v370
      %v409 = vpop.f32.mrf.mxu0
      %v410 = vadd.f32 %v367, %v409
      %v411 = vpop.f32.mrf.mxu0
      %v412 = vpop.f32.mrf.mxu0
      %v413 = vpop.f32.mrf.mxu0
      %414 = vdwg.mxu0
      %v415 = vmul.f32 %v410, 0.35355338
      %s416 = scalar_lea.vmem %s5, 4
      %v417 = vld [vmem:[%s416] sm:$0x1]
      %v418 = vlaneseq
      %v419 = vshrl.u32 %v418, 7
      %v420 = vsub.s32 0, %v419
      %v421 = vrot.slane %v417, %v420
      %v423 = vsel %vm368, %v350, 0
      %v426 = vsel %vm368, %v359, 0
      %428 = vmatprep.subr.bf16.mxu0 0
      %429 = vmatpush1.bf16.xpose.msra.mxu0 0
      %430 = vmatprep.subr.bf16.mxu0 0
      %431 = vmatpush1.bf16.xpose.msra.mxu0 0
      %432 = vmatprep.subr.bf16.mxu0 0
      %433 = vmatpush1.bf16.xpose.msra.mxu0 0
      %434 = vmatprep.subr.bf16.mxu0 0
      %435 = vmatpush1.bf16.xpose.msra.mxu0 0
      %436 = vmatprep.subr.bf16.mxu0 0
      %437 = vmatpush1.bf16.xpose.msra.mxu0 0
      %438 = vmatprep.subr.bf16.mxu0 0
      %439 = vmatpush1.bf16.xpose.msra.mxu0 0
      %440 = vmatprep.subr.bf16.mxu0 0
      %441 = vmatpush1.bf16.xpose.msra.mxu0 0
      %442 = vmatprep.subr.bf16.mxu0 0
      %443 = vmatpush1.bf16.xpose.msra.mxu0 %v426
      %444 = vmatprep.subr.bf16.mxu0 0
      %445 = vmatpush2.bf16.xpose.msra.mxu0 0
      %446 = vmatprep.subr.bf16.mxu0 0
      %447 = vmatpush2.bf16.xpose.msra.mxu0 0
      %448 = vmatprep.subr.bf16.mxu0 0
      %449 = vmatpush2.bf16.xpose.msra.mxu0 0
      %450 = vmatprep.subr.bf16.mxu0 0
      %451 = vmatpush2.bf16.xpose.msra.mxu0 0
      %452 = vmatprep.subr.bf16.mxu0 0
      %453 = vmatpush2.bf16.xpose.msra.mxu0 0
      %454 = vmatprep.subr.bf16.mxu0 0
      %455 = vmatpush2.bf16.xpose.msra.mxu0 0
      %456 = vmatprep.subr.bf16.mxu0 0
      %457 = vmatpush2.bf16.xpose.msra.mxu0 0
      %458 = vmatprep.subr.bf16.mxu0 0
      %459 = vmatpush2.bf16.xpose.msra.mxu0 0
      %460 = vmatprep.mubr.bf16.mxu0 0
      %461 = vmatmul.mubr.bf16.gmra.mxu0 %v423
      %v462 = vpop.f32.mrf.mxu0
      %v463 = vadd.f32 %v421, %v462
      %v464 = vpop.f32.mrf.mxu0
      %v465 = vpop.f32.mrf.mxu0
      %v466 = vpop.f32.mrf.mxu0
      %467 = vdwg.mxu0
      %s468 = scalar_lea.vmem %s5, 8
      %v469 = vld [vmem:[%s468] sm:$0x1]
      %v470 = vlaneseq
      %v471 = vshrl.u32 %v470, 7
      %v472 = vsub.s32 0, %v471
      %v473 = vrot.slane %v469, %v472
      %v475 = vsel %vm368, %v352, 0
      %v478 = vsel %vm368, %v362, 0
      %480 = vmatprep.subr.bf16.mxu0 0
      %481 = vmatpush1.bf16.xpose.msra.mxu0 0
      %482 = vmatprep.subr.bf16.mxu0 0
      %483 = vmatpush1.bf16.xpose.msra.mxu0 0
      %484 = vmatprep.subr.bf16.mxu0 0
      %485 = vmatpush1.bf16.xpose.msra.mxu0 0
      %486 = vmatprep.subr.bf16.mxu0 0
      %487 = vmatpush1.bf16.xpose.msra.mxu0 0
      %488 = vmatprep.subr.bf16.mxu0 0
      %489 = vmatpush1.bf16.xpose.msra.mxu0 0
      %490 = vmatprep.subr.bf16.mxu0 0
      %491 = vmatpush1.bf16.xpose.msra.mxu0 0
      %492 = vmatprep.subr.bf16.mxu0 0
      %493 = vmatpush1.bf16.xpose.msra.mxu0 0
      %494 = vmatprep.subr.bf16.mxu0 0
      %495 = vmatpush1.bf16.xpose.msra.mxu0 %v478
      %496 = vmatprep.subr.bf16.mxu0 0
      %497 = vmatpush2.bf16.xpose.msra.mxu0 0
      %498 = vmatprep.subr.bf16.mxu0 0
      %499 = vmatpush2.bf16.xpose.msra.mxu0 0
      %500 = vmatprep.subr.bf16.mxu0 0
      %501 = vmatpush2.bf16.xpose.msra.mxu0 0
      %502 = vmatprep.subr.bf16.mxu0 0
      %503 = vmatpush2.bf16.xpose.msra.mxu0 0
      %504 = vmatprep.subr.bf16.mxu0 0
      %505 = vmatpush2.bf16.xpose.msra.mxu0 0
      %506 = vmatprep.subr.bf16.mxu0 0
      %507 = vmatpush2.bf16.xpose.msra.mxu0 0
      %508 = vmatprep.subr.bf16.mxu0 0
      %509 = vmatpush2.bf16.xpose.msra.mxu0 0
      %510 = vmatprep.subr.bf16.mxu0 0
      %511 = vmatpush2.bf16.xpose.msra.mxu0 0
      %512 = vmatprep.mubr.bf16.mxu0 0
      %513 = vmatmul.mubr.bf16.gmra.mxu0 %v475
      %v514 = vpop.f32.mrf.mxu0
      %v515 = vadd.f32 %v473, %v514
      %v516 = vpop.f32.mrf.mxu0
      %v517 = vpop.f32.mrf.mxu0
      %v518 = vpop.f32.mrf.mxu0
      %519 = vdwg.mxu0
      %v520 = vld [vmem:[%s4 + $0x8] sm:$0xff]
      %v521 = vpack.c.bf16 %v520, %v520
      %v522 = vld [vmem:[%s357 + $0x8] sm:$0xff]
      %v523 = vpack.c.bf16 %v522, %v522
      %v524 = vld [vmem:[%s360 + $0x8] sm:$0xff]
      %v525 = vpack.c.bf16 %v524, %v524
      %v526 = vld [vmem:[%s5 + $0x1] sm:$0x1]
      %v527 = vlaneseq
      %v528 = vshrl.u32 %v527, 7
      %v529 = vsub.s32 0, %v528
      %v530 = vrot.slane %v526, %v529
      %v532 = vsel %vm368, %v521, 0
      %534 = vmatprep.subr.bf16.mxu0 0
      %535 = vmatpush1.bf16.xpose.msra.mxu0 0
      %536 = vmatprep.subr.bf16.mxu0 0
      %537 = vmatpush1.bf16.xpose.msra.mxu0 0
      %538 = vmatprep.subr.bf16.mxu0 0
      %539 = vmatpush1.bf16.xpose.msra.mxu0 0
      %540 = vmatprep.subr.bf16.mxu0 0
      %541 = vmatpush1.bf16.xpose.msra.mxu0 0
      %542 = vmatprep.subr.bf16.mxu0 0
      %543 = vmatpush1.bf16.xpose.msra.mxu0 0
      %544 = vmatprep.subr.bf16.mxu0 0
      %545 = vmatpush1.bf16.xpose.msra.mxu0 0
      %546 = vmatprep.subr.bf16.mxu0 0
      %547 = vmatpush1.bf16.xpose.msra.mxu0 0
      %548 = vmatprep.subr.bf16.mxu0 0
      %549 = vmatpush1.bf16.xpose.msra.mxu0 %v532
      %550 = vmatprep.subr.bf16.mxu0 0
      %551 = vmatpush2.bf16.xpose.msra.mxu0 0
      %552 = vmatprep.subr.bf16.mxu0 0
      %553 = vmatpush2.bf16.xpose.msra.mxu0 0
      %554 = vmatprep.subr.bf16.mxu0 0
      %555 = vmatpush2.bf16.xpose.msra.mxu0 0
      %556 = vmatprep.subr.bf16.mxu0 0
      %557 = vmatpush2.bf16.xpose.msra.mxu0 0
      %558 = vmatprep.subr.bf16.mxu0 0
      %559 = vmatpush2.bf16.xpose.msra.mxu0 0
      %560 = vmatprep.subr.bf16.mxu0 0
      %561 = vmatpush2.bf16.xpose.msra.mxu0 0
      %562 = vmatprep.subr.bf16.mxu0 0
      %563 = vmatpush2.bf16.xpose.msra.mxu0 0
      %564 = vmatprep.subr.bf16.mxu0 0
      %565 = vmatpush2.bf16.xpose.msra.mxu0 0
      %566 = vmatprep.mubr.bf16.mxu0 0
      %567 = vmatmul.mubr.bf16.gmra.mxu0 %v370
      %v568 = vpop.f32.mrf.mxu0
      %v569 = vadd.f32 %v530, %v568
      %v570 = vpop.f32.mrf.mxu0
      %v571 = vpop.f32.mrf.mxu0
      %v572 = vpop.f32.mrf.mxu0
      %573 = vdwg.mxu0
      %v574 = vmul.f32 %v569, 0.35355338
      %v575 = vld [vmem:[%s416 + $0x1] sm:$0x1]
      %v576 = vlaneseq
      %v577 = vshrl.u32 %v576, 7
      %v578 = vsub.s32 0, %v577
      %v579 = vrot.slane %v575, %v578
      %v581 = vsel %vm368, %v523, 0
      %583 = vmatprep.subr.bf16.mxu0 0
      %584 = vmatpush1.bf16.xpose.msra.mxu0 0
      %585 = vmatprep.subr.bf16.mxu0 0
      %586 = vmatpush1.bf16.xpose.msra.mxu0 0
      %587 = vmatprep.subr.bf16.mxu0 0
      %588 = vmatpush1.bf16.xpose.msra.mxu0 0
      %589 = vmatprep.subr.bf16.mxu0 0
      %590 = vmatpush1.bf16.xpose.msra.mxu0 0
      %591 = vmatprep.subr.bf16.mxu0 0
      %592 = vmatpush1.bf16.xpose.msra.mxu0 0
      %593 = vmatprep.subr.bf16.mxu0 0
      %594 = vmatpush1.bf16.xpose.msra.mxu0 0
      %595 = vmatprep.subr.bf16.mxu0 0
      %596 = vmatpush1.bf16.xpose.msra.mxu0 0
      %597 = vmatprep.subr.bf16.mxu0 0
      %598 = vmatpush1.bf16.xpose.msra.mxu0 %v581
      %599 = vmatprep.subr.bf16.mxu0 0
      %600 = vmatpush2.bf16.xpose.msra.mxu0 0
      %601 = vmatprep.subr.bf16.mxu0 0
      %602 = vmatpush2.bf16.xpose.msra.mxu0 0
      %603 = vmatprep.subr.bf16.mxu0 0
      %604 = vmatpush2.bf16.xpose.msra.mxu0 0
      %605 = vmatprep.subr.bf16.mxu0 0
      %606 = vmatpush2.bf16.xpose.msra.mxu0 0
      %607 = vmatprep.subr.bf16.mxu0 0
      %608 = vmatpush2.bf16.xpose.msra.mxu0 0
      %609 = vmatprep.subr.bf16.mxu0 0
      %610 = vmatpush2.bf16.xpose.msra.mxu0 0
      %611 = vmatprep.subr.bf16.mxu0 0
      %612 = vmatpush2.bf16.xpose.msra.mxu0 0
      %613 = vmatprep.subr.bf16.mxu0 0
      %614 = vmatpush2.bf16.xpose.msra.mxu0 0
      %615 = vmatprep.mubr.bf16.mxu0 0
      %616 = vmatmul.mubr.bf16.gmra.mxu0 %v423
      %v617 = vpop.f32.mrf.mxu0
      %v618 = vadd.f32 %v579, %v617
      %v619 = vpop.f32.mrf.mxu0
      %v620 = vpop.f32.mrf.mxu0
      %v621 = vpop.f32.mrf.mxu0
      %622 = vdwg.mxu0
      %v623 = vld [vmem:[%s468 + $0x1] sm:$0x1]
      %v624 = vlaneseq
      %v625 = vshrl.u32 %v624, 7
      %v626 = vsub.s32 0, %v625
      %v627 = vrot.slane %v623, %v626
      %v629 = vsel %vm368, %v525, 0
      %631 = vmatprep.subr.bf16.mxu0 0
      %632 = vmatpush1.bf16.xpose.msra.mxu0 0
      %633 = vmatprep.subr.bf16.mxu0 0
      %634 = vmatpush1.bf16.xpose.msra.mxu0 0
      %635 = vmatprep.subr.bf16.mxu0 0
      %636 = vmatpush1.bf16.xpose.msra.mxu0 0
      %637 = vmatprep.subr.bf16.mxu0 0
      %638 = vmatpush1.bf16.xpose.msra.mxu0 0
      %639 = vmatprep.subr.bf16.mxu0 0
      %640 = vmatpush1.bf16.xpose.msra.mxu0 0
      %641 = vmatprep.subr.bf16.mxu0 0
      %642 = vmatpush1.bf16.xpose.msra.mxu0 0
      %643 = vmatprep.subr.bf16.mxu0 0
      %644 = vmatpush1.bf16.xpose.msra.mxu0 0
      %645 = vmatprep.subr.bf16.mxu0 0
      %646 = vmatpush1.bf16.xpose.msra.mxu0 %v629
      %647 = vmatprep.subr.bf16.mxu0 0
      %648 = vmatpush2.bf16.xpose.msra.mxu0 0
      %649 = vmatprep.subr.bf16.mxu0 0
      %650 = vmatpush2.bf16.xpose.msra.mxu0 0
      %651 = vmatprep.subr.bf16.mxu0 0
      %652 = vmatpush2.bf16.xpose.msra.mxu0 0
      %653 = vmatprep.subr.bf16.mxu0 0
      %654 = vmatpush2.bf16.xpose.msra.mxu0 0
      %655 = vmatprep.subr.bf16.mxu0 0
      %656 = vmatpush2.bf16.xpose.msra.mxu0 0
      %657 = vmatprep.subr.bf16.mxu0 0
      %658 = vmatpush2.bf16.xpose.msra.mxu0 0
      %659 = vmatprep.subr.bf16.mxu0 0
      %660 = vmatpush2.bf16.xpose.msra.mxu0 0
      %661 = vmatprep.subr.bf16.mxu0 0
      %662 = vmatpush2.bf16.xpose.msra.mxu0 0
      %663 = vmatprep.mubr.bf16.mxu0 0
      %664 = vmatmul.mubr.bf16.gmra.mxu0 %v475
      %v665 = vpop.f32.mrf.mxu0
      %v666 = vadd.f32 %v627, %v665
      %v667 = vpop.f32.mrf.mxu0
      %v668 = vpop.f32.mrf.mxu0
      %v669 = vpop.f32.mrf.mxu0
      %670 = vdwg.mxu0
      %v671 = vld [vmem:[%s4 + $0x10] sm:$0xff]
      %v672 = vpack.c.bf16 %v671, %v671
      %v673 = vld [vmem:[%s357 + $0x10] sm:$0xff]
      %v674 = vpack.c.bf16 %v673, %v673
      %v675 = vld [vmem:[%s360 + $0x10] sm:$0xff]
      %v676 = vpack.c.bf16 %v675, %v675
      %v677 = vld [vmem:[%s5 + $0x2] sm:$0x1]
      %v678 = vlaneseq
      %v679 = vshrl.u32 %v678, 7
      %v680 = vsub.s32 0, %v679
      %v681 = vrot.slane %v677, %v680
      %v683 = vsel %vm368, %v672, 0
      %685 = vmatprep.subr.bf16.mxu0 0
      %686 = vmatpush1.bf16.xpose.msra.mxu0 0
      %687 = vmatprep.subr.bf16.mxu0 0
      %688 = vmatpush1.bf16.xpose.msra.mxu0 0
      %689 = vmatprep.subr.bf16.mxu0 0
      %690 = vmatpush1.bf16.xpose.msra.mxu0 0
      %691 = vmatprep.subr.bf16.mxu0 0
      %692 = vmatpush1.bf16.xpose.msra.mxu0 0
      %693 = vmatprep.subr.bf16.mxu0 0
      %694 = vmatpush1.bf16.xpose.msra.mxu0 0
      %695 = vmatprep.subr.bf16.mxu0 0
      %696 = vmatpush1.bf16.xpose.msra.mxu0 0
      %697 = vmatprep.subr.bf16.mxu0 0
      %698 = vmatpush1.bf16.xpose.msra.mxu0 0
      %699 = vmatprep.subr.bf16.mxu0 0
      %700 = vmatpush1.bf16.xpose.msra.mxu0 %v683
      %701 = vmatprep.subr.bf16.mxu0 0
      %702 = vmatpush2.bf16.xpose.msra.mxu0 0
      %703 = vmatprep.subr.bf16.mxu0 0
      %704 = vmatpush2.bf16.xpose.msra.mxu0 0
      %705 = vmatprep.subr.bf16.mxu0 0
      %706 = vmatpush2.bf16.xpose.msra.mxu0 0
      %707 = vmatprep.subr.bf16.mxu0 0
      %708 = vmatpush2.bf16.xpose.msra.mxu0 0
      %709 = vmatprep.subr.bf16.mxu0 0
      %710 = vmatpush2.bf16.xpose.msra.mxu0 0
      %711 = vmatprep.subr.bf16.mxu0 0
      %712 = vmatpush2.bf16.xpose.msra.mxu0 0
      %713 = vmatprep.subr.bf16.mxu0 0
      %714 = vmatpush2.bf16.xpose.msra.mxu0 0
      %715 = vmatprep.subr.bf16.mxu0 0
      %716 = vmatpush2.bf16.xpose.msra.mxu0 0
      %717 = vmatprep.mubr.bf16.mxu0 0
      %718 = vmatmul.mubr.bf16.gmra.mxu0 %v370
      %v719 = vpop.f32.mrf.mxu0
      %v720 = vadd.f32 %v681, %v719
      %v721 = vpop.f32.mrf.mxu0
      %v722 = vpop.f32.mrf.mxu0
      %v723 = vpop.f32.mrf.mxu0
      %724 = vdwg.mxu0
      %v725 = vmul.f32 %v720, 0.35355338
      %v726 = vld [vmem:[%s416 + $0x2] sm:$0x1]
      %v727 = vlaneseq
      %v728 = vshrl.u32 %v727, 7
      %v729 = vsub.s32 0, %v728
      %v730 = vrot.slane %v726, %v729
      %v732 = vsel %vm368, %v674, 0
      %734 = vmatprep.subr.bf16.mxu0 0
      %735 = vmatpush1.bf16.xpose.msra.mxu0 0
      %736 = vmatprep.subr.bf16.mxu0 0
      %737 = vmatpush1.bf16.xpose.msra.mxu0 0
      %738 = vmatprep.subr.bf16.mxu0 0
      %739 = vmatpush1.bf16.xpose.msra.mxu0 0
      %740 = vmatprep.subr.bf16.mxu0 0
      %741 = vmatpush1.bf16.xpose.msra.mxu0 0
      %742 = vmatprep.subr.bf16.mxu0 0
      %743 = vmatpush1.bf16.xpose.msra.mxu0 0
      %744 = vmatprep.subr.bf16.mxu0 0
      %745 = vmatpush1.bf16.xpose.msra.mxu0 0
      %746 = vmatprep.subr.bf16.mxu0 0
      %747 = vmatpush1.bf16.xpose.msra.mxu0 0
      %748 = vmatprep.subr.bf16.mxu0 0
      %749 = vmatpush1.bf16.xpose.msra.mxu0 %v732
      %750 = vmatprep.subr.bf16.mxu0 0
      %751 = vmatpush2.bf16.xpose.msra.mxu0 0
      %752 = vmatprep.subr.bf16.mxu0 0
      %753 = vmatpush2.bf16.xpose.msra.mxu0 0
      %754 = vmatprep.subr.bf16.mxu0 0
      %755 = vmatpush2.bf16.xpose.msra.mxu0 0
      %756 = vmatprep.subr.bf16.mxu0 0
      %757 = vmatpush2.bf16.xpose.msra.mxu0 0
      %758 = vmatprep.subr.bf16.mxu0 0
      %759 = vmatpush2.bf16.xpose.msra.mxu0 0
      %760 = vmatprep.subr.bf16.mxu0 0
      %761 = vmatpush2.bf16.xpose.msra.mxu0 0
      %762 = vmatprep.subr.bf16.mxu0 0
      %763 = vmatpush2.bf16.xpose.msra.mxu0 0
      %764 = vmatprep.subr.bf16.mxu0 0
      %765 = vmatpush2.bf16.xpose.msra.mxu0 0
      %766 = vmatprep.mubr.bf16.mxu0 0
      %767 = vmatmul.mubr.bf16.gmra.mxu0 %v423
      %v768 = vpop.f32.mrf.mxu0
      %v769 = vadd.f32 %v730, %v768
      %v770 = vpop.f32.mrf.mxu0
      %v771 = vpop.f32.mrf.mxu0
      %v772 = vpop.f32.mrf.mxu0
      %773 = vdwg.mxu0
      %v774 = vld [vmem:[%s468 + $0x2] sm:$0x1]
      %v775 = vlaneseq
      %v776 = vshrl.u32 %v775, 7
      %v777 = vsub.s32 0, %v776
      %v778 = vrot.slane %v774, %v777
      %v780 = vsel %vm368, %v676, 0
      %782 = vmatprep.subr.bf16.mxu0 0
      %783 = vmatpush1.bf16.xpose.msra.mxu0 0
      %784 = vmatprep.subr.bf16.mxu0 0
      %785 = vmatpush1.bf16.xpose.msra.mxu0 0
      %786 = vmatprep.subr.bf16.mxu0 0
      %787 = vmatpush1.bf16.xpose.msra.mxu0 0
      %788 = vmatprep.subr.bf16.mxu0 0
      %789 = vmatpush1.bf16.xpose.msra.mxu0 0
      %790 = vmatprep.subr.bf16.mxu0 0
      %791 = vmatpush1.bf16.xpose.msra.mxu0 0
      %792 = vmatprep.subr.bf16.mxu0 0
      %793 = vmatpush1.bf16.xpose.msra.mxu0 0
      %794 = vmatprep.subr.bf16.mxu0 0
      %795 = vmatpush1.bf16.xpose.msra.mxu0 0
      %796 = vmatprep.subr.bf16.mxu0 0
      %797 = vmatpush1.bf16.xpose.msra.mxu0 %v780
      %798 = vmatprep.subr.bf16.mxu0 0
      %799 = vmatpush2.bf16.xpose.msra.mxu0 0
      %800 = vmatprep.subr.bf16.mxu0 0
      %801 = vmatpush2.bf16.xpose.msra.mxu0 0
      %802 = vmatprep.subr.bf16.mxu0 0
      %803 = vmatpush2.bf16.xpose.msra.mxu0 0
      %804 = vmatprep.subr.bf16.mxu0 0
      %805 = vmatpush2.bf16.xpose.msra.mxu0 0
      %806 = vmatprep.subr.bf16.mxu0 0
      %807 = vmatpush2.bf16.xpose.msra.mxu0 0
      %808 = vmatprep.subr.bf16.mxu0 0
      %809 = vmatpush2.bf16.xpose.msra.mxu0 0
      %810 = vmatprep.subr.bf16.mxu0 0
      %811 = vmatpush2.bf16.xpose.msra.mxu0 0
      %812 = vmatprep.subr.bf16.mxu0 0
      %813 = vmatpush2.bf16.xpose.msra.mxu0 0
      %814 = vmatprep.mubr.bf16.mxu0 0
      %815 = vmatmul.mubr.bf16.gmra.mxu0 %v475
      %v816 = vpop.f32.mrf.mxu0
      %v817 = vadd.f32 %v778, %v816
      %v818 = vpop.f32.mrf.mxu0
      %v819 = vpop.f32.mrf.mxu0
      %v820 = vpop.f32.mrf.mxu0
      %821 = vdwg.mxu0
      %v822 = vld [vmem:[%s4 + $0x18] sm:$0xff]
      %v823 = vpack.c.bf16 %v822, %v822
      %v824 = vld [vmem:[%s357 + $0x18] sm:$0xff]
      %v825 = vpack.c.bf16 %v824, %v824
      %v826 = vld [vmem:[%s360 + $0x18] sm:$0xff]
      %v827 = vpack.c.bf16 %v826, %v826
      %v828 = vld [vmem:[%s5 + $0x3] sm:$0x1]
      %v829 = vlaneseq
      %v830 = vshrl.u32 %v829, 7
      %v831 = vsub.s32 0, %v830
      %v832 = vrot.slane %v828, %v831
      %v834 = vsel %vm368, %v823, 0
      %836 = vmatprep.subr.bf16.mxu0 0
      %837 = vmatpush1.bf16.xpose.msra.mxu0 0
      %838 = vmatprep.subr.bf16.mxu0 0
      %839 = vmatpush1.bf16.xpose.msra.mxu0 0
      %840 = vmatprep.subr.bf16.mxu0 0
      %841 = vmatpush1.bf16.xpose.msra.mxu0 0
      %842 = vmatprep.subr.bf16.mxu0 0
      %843 = vmatpush1.bf16.xpose.msra.mxu0 0
      %844 = vmatprep.subr.bf16.mxu0 0
      %845 = vmatpush1.bf16.xpose.msra.mxu0 0
      %846 = vmatprep.subr.bf16.mxu0 0
      %847 = vmatpush1.bf16.xpose.msra.mxu0 0
      %848 = vmatprep.subr.bf16.mxu0 0
      %849 = vmatpush1.bf16.xpose.msra.mxu0 0
      %850 = vmatprep.subr.bf16.mxu0 0
      %851 = vmatpush1.bf16.xpose.msra.mxu0 %v834
      %852 = vmatprep.subr.bf16.mxu0 0
      %853 = vmatpush2.bf16.xpose.msra.mxu0 0
      %854 = vmatprep.subr.bf16.mxu0 0
      %855 = vmatpush2.bf16.xpose.msra.mxu0 0
      %856 = vmatprep.subr.bf16.mxu0 0
      %857 = vmatpush2.bf16.xpose.msra.mxu0 0
      %858 = vmatprep.subr.bf16.mxu0 0
      %859 = vmatpush2.bf16.xpose.msra.mxu0 0
      %860 = vmatprep.subr.bf16.mxu0 0
      %861 = vmatpush2.bf16.xpose.msra.mxu0 0
      %862 = vmatprep.subr.bf16.mxu0 0
      %863 = vmatpush2.bf16.xpose.msra.mxu0 0
      %864 = vmatprep.subr.bf16.mxu0 0
      %865 = vmatpush2.bf16.xpose.msra.mxu0 0
      %866 = vmatprep.subr.bf16.mxu0 0
      %867 = vmatpush2.bf16.xpose.msra.mxu0 0
      %868 = vmatprep.mubr.bf16.mxu0 0
      %869 = vmatmul.mubr.bf16.gmra.mxu0 %v370
      %v870 = vpop.f32.mrf.mxu0
      %v871 = vadd.f32 %v832, %v870
      %v872 = vpop.f32.mrf.mxu0
      %v873 = vpop.f32.mrf.mxu0
      %v874 = vpop.f32.mrf.mxu0
      %875 = vdwg.mxu0
      %v876 = vmul.f32 %v871, 0.35355338
      %v877 = vld [vmem:[%s416 + $0x3] sm:$0x1]
      %v878 = vlaneseq
      %v879 = vshrl.u32 %v878, 7
      %v880 = vsub.s32 0, %v879
      %v881 = vrot.slane %v877, %v880
      %v883 = vsel %vm368, %v825, 0
      %885 = vmatprep.subr.bf16.mxu0 0
      %886 = vmatpush1.bf16.xpose.msra.mxu0 0
      %887 = vmatprep.subr.bf16.mxu0 0
      %888 = vmatpush1.bf16.xpose.msra.mxu0 0
      %889 = vmatprep.subr.bf16.mxu0 0
      %890 = vmatpush1.bf16.xpose.msra.mxu0 0
      %891 = vmatprep.subr.bf16.mxu0 0
      %892 = vmatpush1.bf16.xpose.msra.mxu0 0
      %893 = vmatprep.subr.bf16.mxu0 0
      %894 = vmatpush1.bf16.xpose.msra.mxu0 0
      %895 = vmatprep.subr.bf16.mxu0 0
      %896 = vmatpush1.bf16.xpose.msra.mxu0 0
      %897 = vmatprep.subr.bf16.mxu0 0
      %898 = vmatpush1.bf16.xpose.msra.mxu0 0
      %899 = vmatprep.subr.bf16.mxu0 0
      %900 = vmatpush1.bf16.xpose.msra.mxu0 %v883
      %901 = vmatprep.subr.bf16.mxu0 0
      %902 = vmatpush2.bf16.xpose.msra.mxu0 0
      %903 = vmatprep.subr.bf16.mxu0 0
      %904 = vmatpush2.bf16.xpose.msra.mxu0 0
      %905 = vmatprep.subr.bf16.mxu0 0
      %906 = vmatpush2.bf16.xpose.msra.mxu0 0
      %907 = vmatprep.subr.bf16.mxu0 0
      %908 = vmatpush2.bf16.xpose.msra.mxu0 0
      %909 = vmatprep.subr.bf16.mxu0 0
      %910 = vmatpush2.bf16.xpose.msra.mxu0 0
      %911 = vmatprep.subr.bf16.mxu0 0
      %912 = vmatpush2.bf16.xpose.msra.mxu0 0
      %913 = vmatprep.subr.bf16.mxu0 0
      %914 = vmatpush2.bf16.xpose.msra.mxu0 0
      %915 = vmatprep.subr.bf16.mxu0 0
      %916 = vmatpush2.bf16.xpose.msra.mxu0 0
      %917 = vmatprep.mubr.bf16.mxu0 0
      %918 = vmatmul.mubr.bf16.gmra.mxu0 %v423
      %v919 = vpop.f32.mrf.mxu0
      %v920 = vadd.f32 %v881, %v919
      %v921 = vpop.f32.mrf.mxu0
      %v922 = vpop.f32.mrf.mxu0
      %v923 = vpop.f32.mrf.mxu0
      %924 = vdwg.mxu0
      %v925 = vld [vmem:[%s468 + $0x3] sm:$0x1]
      %v926 = vlaneseq
      %v927 = vshrl.u32 %v926, 7
      %v928 = vsub.s32 0, %v927
      %v929 = vrot.slane %v925, %v928
      %v931 = vsel %vm368, %v827, 0
      %933 = vmatprep.subr.bf16.mxu0 0
      %934 = vmatpush1.bf16.xpose.msra.mxu0 0
      %935 = vmatprep.subr.bf16.mxu0 0
      %936 = vmatpush1.bf16.xpose.msra.mxu0 0
      %937 = vmatprep.subr.bf16.mxu0 0
      %938 = vmatpush1.bf16.xpose.msra.mxu0 0
      %939 = vmatprep.subr.bf16.mxu0 0
      %940 = vmatpush1.bf16.xpose.msra.mxu0 0
      %941 = vmatprep.subr.bf16.mxu0 0
      %942 = vmatpush1.bf16.xpose.msra.mxu0 0
      %943 = vmatprep.subr.bf16.mxu0 0
      %944 = vmatpush1.bf16.xpose.msra.mxu0 0
      %945 = vmatprep.subr.bf16.mxu0 0
      %946 = vmatpush1.bf16.xpose.msra.mxu0 0
      %947 = vmatprep.subr.bf16.mxu0 0
      %948 = vmatpush1.bf16.xpose.msra.mxu0 %v931
      %949 = vmatprep.subr.bf16.mxu0 0
      %950 = vmatpush2.bf16.xpose.msra.mxu0 0
      %951 = vmatprep.subr.bf16.mxu0 0
      %952 = vmatpush2.bf16.xpose.msra.mxu0 0
      %953 = vmatprep.subr.bf16.mxu0 0
      %954 = vmatpush2.bf16.xpose.msra.mxu0 0
      %955 = vmatprep.subr.bf16.mxu0 0
      %956 = vmatpush2.bf16.xpose.msra.mxu0 0
      %957 = vmatprep.subr.bf16.mxu0 0
      %958 = vmatpush2.bf16.xpose.msra.mxu0 0
      %959 = vmatprep.subr.bf16.mxu0 0
      %960 = vmatpush2.bf16.xpose.msra.mxu0 0
      %961 = vmatprep.subr.bf16.mxu0 0
      %962 = vmatpush2.bf16.xpose.msra.mxu0 0
      %963 = vmatprep.subr.bf16.mxu0 0
      %964 = vmatpush2.bf16.xpose.msra.mxu0 0
      %965 = vmatprep.mubr.bf16.mxu0 0
      %966 = vmatmul.mubr.bf16.gmra.mxu0 %v475
      %v967 = vpop.f32.mrf.mxu0
      %v968 = vadd.f32 %v929, %v967
      %v969 = vpop.f32.mrf.mxu0
      %v970 = vpop.f32.mrf.mxu0
      %v971 = vpop.f32.mrf.mxu0
      %972 = vdwg.mxu0
      %v973 = vpack.c.bf16 %v415, %v415
      %v974 = vpack.c.bf16 %v574, %v574
      %v975 = vpack.c.bf16 %v725, %v725
      %v976 = vpack.c.bf16 %v876, %v876
      %v977 = vpack.c.bf16 %v463, %v463
      %v978 = vpack.c.bf16 %v618, %v618
      %v979 = vpack.c.bf16 %v769, %v769
      %v980 = vpack.c.bf16 %v920, %v920
      %v981 = vpack.c.bf16 %v515, %v515
      %v982 = vpack.c.bf16 %v666, %v666
      %v983 = vpack.c.bf16 %v817, %v817
      %v984 = vpack.c.bf16 %v968, %v968
      %vm985 = vcmask 64512
      %v987 = vsel %vm985, %v973, 0
      %v990 = vsel %vm985, %v977, 0
      %992 = vmatprep.subr.bf16.mxu0 0
      %993 = vmatpush1.bf16.xpose.msra.mxu0 0
      %994 = vmatprep.subr.bf16.mxu0 0
      %995 = vmatpush1.bf16.xpose.msra.mxu0 0
      %996 = vmatprep.subr.bf16.mxu0 0
      %997 = vmatpush1.bf16.xpose.msra.mxu0 0
      %998 = vmatprep.subr.bf16.mxu0 0
      %999 = vmatpush1.bf16.xpose.msra.mxu0 0
      %1000 = vmatprep.subr.bf16.mxu0 0
      %1001 = vmatpush1.bf16.xpose.msra.mxu0 0
      %1002 = vmatprep.subr.bf16.mxu0 0
      %1003 = vmatpush1.bf16.xpose.msra.mxu0 0
      %1004 = vmatprep.subr.bf16.mxu0 0
      %1005 = vmatpush1.bf16.xpose.msra.mxu0 0
      %1006 = vmatprep.subr.bf16.mxu0 0
      %1007 = vmatpush1.bf16.xpose.msra.mxu0 %v990
      %1008 = vmatprep.subr.bf16.mxu0 0
      %1009 = vmatpush2.bf16.xpose.msra.mxu0 0
      %1010 = vmatprep.subr.bf16.mxu0 0
      %1011 = vmatpush2.bf16.xpose.msra.mxu0 0
      %1012 = vmatprep.subr.bf16.mxu0 0
      %1013 = vmatpush2.bf16.xpose.msra.mxu0 0
      %1014 = vmatprep.subr.bf16.mxu0 0
      %1015 = vmatpush2.bf16.xpose.msra.mxu0 0
      %1016 = vmatprep.subr.bf16.mxu0 0
      %1017 = vmatpush2.bf16.xpose.msra.mxu0 0
      %1018 = vmatprep.subr.bf16.mxu0 0
      %1019 = vmatpush2.bf16.xpose.msra.mxu0 0
      %1020 = vmatprep.subr.bf16.mxu0 0
      %1021 = vmatpush2.bf16.xpose.msra.mxu0 0
      %1022 = vmatprep.subr.bf16.mxu0 0
      %1023 = vmatpush2.bf16.xpose.msra.mxu0 0
      %1024 = vmatprep.mubr.bf16.mxu0 0
      %1025 = vmatmul.mubr.bf16.gmra.mxu0 %v987
      %v1026 = vpop.f32.mrf.mxu0
      %v1027 = vadd.f32 %v354, %v1026
      %v1028 = vpop.f32.mrf.mxu0
      %v1029 = vpop.f32.mrf.mxu0
      %v1030 = vpop.f32.mrf.mxu0
      %1031 = vdwg.mxu0
      %v1033 = vsel %vm985, %v974, 0
      %v1036 = vsel %vm985, %v978, 0
      %1038 = vmatprep.subr.bf16.mxu0 0
      %1039 = vmatpush1.bf16.xpose.msra.mxu0 0
      %1040 = vmatprep.subr.bf16.mxu0 0
      %1041 = vmatpush1.bf16.xpose.msra.mxu0 0
      %1042 = vmatprep.subr.bf16.mxu0 0
      %1043 = vmatpush1.bf16.xpose.msra.mxu0 0
      %1044 = vmatprep.subr.bf16.mxu0 0
      %1045 = vmatpush1.bf16.xpose.msra.mxu0 0
      %1046 = vmatprep.subr.bf16.mxu0 0
      %1047 = vmatpush1.bf16.xpose.msra.mxu0 0
      %1048 = vmatprep.subr.bf16.mxu0 0
      %1049 = vmatpush1.bf16.xpose.msra.mxu0 0
      %1050 = vmatprep.subr.bf16.mxu0 0
      %1051 = vmatpush1.bf16.xpose.msra.mxu0 0
      %1052 = vmatprep.subr.bf16.mxu0 0
      %1053 = vmatpush1.bf16.xpose.msra.mxu0 %v1036
      %1054 = vmatprep.subr.bf16.mxu0 0
      %1055 = vmatpush2.bf16.xpose.msra.mxu0 0
      %1056 = vmatprep.subr.bf16.mxu0 0
      %1057 = vmatpush2.bf16.xpose.msra.mxu0 0
      %1058 = vmatprep.subr.bf16.mxu0 0
      %1059 = vmatpush2.bf16.xpose.msra.mxu0 0
      %1060 = vmatprep.subr.bf16.mxu0 0
      %1061 = vmatpush2.bf16.xpose.msra.mxu0 0
      %1062 = vmatprep.subr.bf16.mxu0 0
      %1063 = vmatpush2.bf16.xpose.msra.mxu0 0
      %1064 = vmatprep.subr.bf16.mxu0 0
      %1065 = vmatpush2.bf16.xpose.msra.mxu0 0
      %1066 = vmatprep.subr.bf16.mxu0 0
      %1067 = vmatpush2.bf16.xpose.msra.mxu0 0
      %1068 = vmatprep.subr.bf16.mxu0 0
      %1069 = vmatpush2.bf16.xpose.msra.mxu0 0
      %1070 = vmatprep.mubr.bf16.mxu0 0
      %1071 = vmatmul.mubr.bf16.gmra.mxu0 %v1033
      %v1072 = vpop.f32.mrf.mxu0
      %v1073 = vadd.f32 %v354, %v1072
      %v1074 = vpop.f32.mrf.mxu0
      %v1075 = vpop.f32.mrf.mxu0
      %v1076 = vpop.f32.mrf.mxu0
      %1077 = vdwg.mxu0
      %v1079 = vsel %vm985, %v975, 0
      %v1082 = vsel %vm985, %v979, 0
      %1084 = vmatprep.subr.bf16.mxu0 0
      %1085 = vmatpush1.bf16.xpose.msra.mxu0 0
      %1086 = vmatprep.subr.bf16.mxu0 0
      %1087 = vmatpush1.bf16.xpose.msra.mxu0 0
      %1088 = vmatprep.subr.bf16.mxu0 0
      %1089 = vmatpush1.bf16.xpose.msra.mxu0 0
      %1090 = vmatprep.subr.bf16.mxu0 0
      %1091 = vmatpush1.bf16.xpose.msra.mxu0 0
      %1092 = vmatprep.subr.bf16.mxu0 0
      %1093 = vmatpush1.bf16.xpose.msra.mxu0 0
      %1094 = vmatprep.subr.bf16.mxu0 0
      %1095 = vmatpush1.bf16.xpose.msra.mxu0 0
      %1096 = vmatprep.subr.bf16.mxu0 0
      %1097 = vmatpush1.bf16.xpose.msra.mxu0 0
      %1098 = vmatprep.subr.bf16.mxu0 0
      %1099 = vmatpush1.bf16.xpose.msra.mxu0 %v1082
      %1100 = vmatprep.subr.bf16.mxu0 0
      %1101 = vmatpush2.bf16.xpose.msra.mxu0 0
      %1102 = vmatprep.subr.bf16.mxu0 0
      %1103 = vmatpush2.bf16.xpose.msra.mxu0 0
      %1104 = vmatprep.subr.bf16.mxu0 0
      %1105 = vmatpush2.bf16.xpose.msra.mxu0 0
      %1106 = vmatprep.subr.bf16.mxu0 0
      %1107 = vmatpush2.bf16.xpose.msra.mxu0 0
      %1108 = vmatprep.subr.bf16.mxu0 0
      %1109 = vmatpush2.bf16.xpose.msra.mxu0 0
      %1110 = vmatprep.subr.bf16.mxu0 0
      %1111 = vmatpush2.bf16.xpose.msra.mxu0 0
      %1112 = vmatprep.subr.bf16.mxu0 0
      %1113 = vmatpush2.bf16.xpose.msra.mxu0 0
      %1114 = vmatprep.subr.bf16.mxu0 0
      %1115 = vmatpush2.bf16.xpose.msra.mxu0 0
      %1116 = vmatprep.mubr.bf16.mxu0 0
      %1117 = vmatmul.mubr.bf16.gmra.mxu0 %v1079
      %v1118 = vpop.f32.mrf.mxu0
      %v1119 = vadd.f32 %v354, %v1118
      %v1120 = vpop.f32.mrf.mxu0
      %v1121 = vpop.f32.mrf.mxu0
      %v1122 = vpop.f32.mrf.mxu0
      %1123 = vdwg.mxu0
      %v1125 = vsel %vm985, %v976, 0
      %v1128 = vsel %vm985, %v980, 0
      %1130 = vmatprep.subr.bf16.mxu0 0
      %1131 = vmatpush1.bf16.xpose.msra.mxu0 0
      %1132 = vmatprep.subr.bf16.mxu0 0
      %1133 = vmatpush1.bf16.xpose.msra.mxu0 0
      %1134 = vmatprep.subr.bf16.mxu0 0
      %1135 = vmatpush1.bf16.xpose.msra.mxu0 0
      %1136 = vmatprep.subr.bf16.mxu0 0
      %1137 = vmatpush1.bf16.xpose.msra.mxu0 0
      %1138 = vmatprep.subr.bf16.mxu0 0
      %1139 = vmatpush1.bf16.xpose.msra.mxu0 0
      %1140 = vmatprep.subr.bf16.mxu0 0
      %1141 = vmatpush1.bf16.xpose.msra.mxu0 0
      %1142 = vmatprep.subr.bf16.mxu0 0
      %1143 = vmatpush1.bf16.xpose.msra.mxu0 0
      %1144 = vmatprep.subr.bf16.mxu0 0
      %1145 = vmatpush1.bf16.xpose.msra.mxu0 %v1128
      %1146 = vmatprep.subr.bf16.mxu0 0
      %1147 = vmatpush2.bf16.xpose.msra.mxu0 0
      %1148 = vmatprep.subr.bf16.mxu0 0
      %1149 = vmatpush2.bf16.xpose.msra.mxu0 0
      %1150 = vmatprep.subr.bf16.mxu0 0
      %1151 = vmatpush2.bf16.xpose.msra.mxu0 0
      %1152 = vmatprep.subr.bf16.mxu0 0
      %1153 = vmatpush2.bf16.xpose.msra.mxu0 0
      %1154 = vmatprep.subr.bf16.mxu0 0
      %1155 = vmatpush2.bf16.xpose.msra.mxu0 0
      %1156 = vmatprep.subr.bf16.mxu0 0
      %1157 = vmatpush2.bf16.xpose.msra.mxu0 0
      %1158 = vmatprep.subr.bf16.mxu0 0
      %1159 = vmatpush2.bf16.xpose.msra.mxu0 0
      %1160 = vmatprep.subr.bf16.mxu0 0
      %1161 = vmatpush2.bf16.xpose.msra.mxu0 0
      %1162 = vmatprep.mubr.bf16.mxu0 0
      %1163 = vmatmul.mubr.bf16.gmra.mxu0 %v1125
      %v1164 = vpop.f32.mrf.mxu0
      %v1165 = vadd.f32 %v354, %v1164
      %v1166 = vpop.f32.mrf.mxu0
      %v1167 = vpop.f32.mrf.mxu0
      %v1168 = vpop.f32.mrf.mxu0
      %1169 = vdwg.mxu0
      %v1170 = vsel %vm985, %v1027, -inf
      %1171 = vmax.xlane.f32.xlu0 %v1170
      %v1172 = vpop.xlane.xlu0 %1171
      %v1173 = vsel %vm985, %v1073, -inf
      %1174 = vmax.xlane.f32.xlu0 %v1173
      %v1175 = vpop.xlane.xlu0 %1174
      %v1176 = vsel %vm985, %v1119, -inf
      %1177 = vmax.xlane.f32.xlu0 %v1176
      %v1178 = vpop.xlane.xlu0 %1177
      %v1179 = vsel %vm985, %v1165, -inf
      %1180 = vmax.xlane.f32.xlu0 %v1179
      %v1181 = vpop.xlane.xlu0 %1180
      %v1182 = vsub.f32 %v1027, %v1172
      %v1183 = vsub.f32 %v1073, %v1175
      %v1184 = vsub.f32 %v1119, %v1178
      %v1185 = vsub.f32 %v1165, %v1181
      %v1186 = vmul.f32 %v1182, 1.442695
      %v1187 = vpow.pop %v1186
      %v1188 = vmul.f32 %v1183, 1.442695
      %v1189 = vpow.pop %v1188
      %v1190 = vmul.f32 %v1184, 1.442695
      %v1191 = vpow.pop %v1190
      %v1192 = vmul.f32 %v1185, 1.442695
      %v1193 = vpow.pop %v1192
      %v1194 = vsel %vm985, %v1187, 0.0
      %1195 = vadd.xlane.f32.xlu0 %v1194
      %v1196 = vpop.xlane.xlu0 %1195
      %v1197 = vsel %vm985, %v1189, 0.0
      %1198 = vadd.xlane.f32.xlu0 %v1197
      %v1199 = vpop.xlane.xlu0 %1198
      %v1200 = vsel %vm985, %v1191, 0.0
      %1201 = vadd.xlane.f32.xlu0 %v1200
      %v1202 = vpop.xlane.xlu0 %1201
      %v1203 = vsel %vm985, %v1193, 0.0
      %1204 = vadd.xlane.f32.xlu0 %v1203
      %v1205 = vpop.xlane.xlu0 %1204
      %v1206 = vrcp.pop %v1196
      %v1207 = vrcp.pop %v1199
      %v1208 = vrcp.pop %v1202
      %v1209 = vrcp.pop %v1205
      %v1210 = vmul.f32 %v1187, %v1206
      %v1211 = vmul.f32 %v1189, %v1207
      %v1212 = vmul.f32 %v1191, %v1208
      %v1213 = vmul.f32 %v1193, %v1209
      %v1215 = vrot.slane %v1210, 1
      %1216 = vrot.lane.b32.xlu0 %v1215, 8
      %v1217 = vpop.permute.xlu0 %1216
      %v1219 = vrot.slane %v1210, 2
      %1220 = vrot.lane.b32.xlu0 %v1219, 16
      %v1221 = vpop.permute.xlu0 %1220
      %v1223 = vrot.slane %v1210, 3
      %1224 = vrot.lane.b32.xlu0 %v1223, 24
      %v1225 = vpop.permute.xlu0 %1224
      %v1227 = vrot.slane %v1210, 4
      %1228 = vrot.lane.b32.xlu0 %v1227, 32
      %v1229 = vpop.permute.xlu0 %1228
      %v1231 = vrot.slane %v1210, 5
      %1232 = vrot.lane.b32.xlu0 %v1231, 40
      %v1233 = vpop.permute.xlu0 %1232
      %v1235 = vrot.slane %v1210, 6
      %1236 = vrot.lane.b32.xlu0 %v1235, 48
      %v1237 = vpop.permute.xlu0 %1236
      %v1239 = vrot.slane %v1210, 7
      %1240 = vrot.lane.b32.xlu0 %v1239, 56
      %v1241 = vpop.permute.xlu0 %1240
      %1244 = vrot.lane.b32.xlu0 %v1211, 64
      %v1245 = vpop.permute.xlu0 %1244
      %v1247 = vrot.slane %v1211, 1
      %1248 = vrot.lane.b32.xlu0 %v1247, 72
      %v1249 = vpop.permute.xlu0 %1248
      %v1251 = vrot.slane %v1211, 2
      %1252 = vrot.lane.b32.xlu0 %v1251, 80
      %v1253 = vpop.permute.xlu0 %1252
      %v1255 = vrot.slane %v1211, 3
      %1256 = vrot.lane.b32.xlu0 %v1255, 88
      %v1257 = vpop.permute.xlu0 %1256
      %v1259 = vrot.slane %v1211, 4
      %1260 = vrot.lane.b32.xlu0 %v1259, 96
      %v1261 = vpop.permute.xlu0 %1260
      %v1263 = vrot.slane %v1211, 5
      %1264 = vrot.lane.b32.xlu0 %v1263, 104
      %v1265 = vpop.permute.xlu0 %1264
      %v1267 = vrot.slane %v1211, 6
      %1268 = vrot.lane.b32.xlu0 %v1267, 112
      %v1269 = vpop.permute.xlu0 %1268
      %v1271 = vrot.slane %v1211, 7
      %1272 = vrot.lane.b32.xlu0 %v1271, 120
      %v1273 = vpop.permute.xlu0 %1272
      %v1275 = vsel %vm985, %v1210, %v1217
      %vm1276 = vcmask 130048
      %v1277 = vsel %vm1276, %v1275, %v1221
      %vm1278 = vcmask 195584
      %v1279 = vsel %vm1278, %v1277, %v1225
      %v1280 = vsel %vm368, %v1279, %v1229
      %vm1281 = vcmask 326656
      %v1282 = vsel %vm1281, %v1280, %v1233
      %vm1283 = vcmask 392192
      %v1284 = vsel %vm1283, %v1282, %v1237
      %vm1285 = vcmask 457728
      %v1286 = vsel %vm1285, %v1284, %v1241
      %vm1287 = vcmask 523264
      %v1288 = vsel %vm1287, %v1286, %v1245
      %vm1289 = vcmask 588800
      %v1290 = vsel %vm1289, %v1288, %v1249
      %vm1291 = vcmask 654336
      %v1292 = vsel %vm1291, %v1290, %v1253
      %vm1293 = vcmask 719872
      %v1294 = vsel %vm1293, %v1292, %v1257
      %vm1295 = vcmask 785408
      %v1296 = vsel %vm1295, %v1294, %v1261
      %vm1297 = vcmask 850944
      %v1298 = vsel %vm1297, %v1296, %v1265
      %vm1299 = vcmask 916480
      %v1300 = vsel %vm1299, %v1298, %v1269
      %vm1301 = vcmask 982016
      %v1302 = vsel %vm1301, %v1300, %v1273
      %v1304 = vrot.slane %v1212, 1
      %1305 = vrot.lane.b32.xlu0 %v1304, 8
      %v1306 = vpop.permute.xlu0 %1305
      %v1308 = vrot.slane %v1212, 2
      %1309 = vrot.lane.b32.xlu0 %v1308, 16
      %v1310 = vpop.permute.xlu0 %1309
      %v1312 = vrot.slane %v1212, 3
      %1313 = vrot.lane.b32.xlu0 %v1312, 24
      %v1314 = vpop.permute.xlu0 %1313
      %v1316 = vrot.slane %v1212, 4
      %1317 = vrot.lane.b32.xlu0 %v1316, 32
      %v1318 = vpop.permute.xlu0 %1317
      %v1320 = vrot.slane %v1212, 5
      %1321 = vrot.lane.b32.xlu0 %v1320, 40
      %v1322 = vpop.permute.xlu0 %1321
      %v1324 = vrot.slane %v1212, 6
      %1325 = vrot.lane.b32.xlu0 %v1324, 48
      %v1326 = vpop.permute.xlu0 %1325
      %v1328 = vrot.slane %v1212, 7
      %1329 = vrot.lane.b32.xlu0 %v1328, 56
      %v1330 = vpop.permute.xlu0 %1329
      %1333 = vrot.lane.b32.xlu0 %v1213, 64
      %v1334 = vpop.permute.xlu0 %1333
      %v1336 = vrot.slane %v1213, 1
      %1337 = vrot.lane.b32.xlu0 %v1336, 72
      %v1338 = vpop.permute.xlu0 %1337
      %v1340 = vrot.slane %v1213, 2
      %1341 = vrot.lane.b32.xlu0 %v1340, 80
      %v1342 = vpop.permute.xlu0 %1341
      %v1344 = vrot.slane %v1213, 3
      %1345 = vrot.lane.b32.xlu0 %v1344, 88
      %v1346 = vpop.permute.xlu0 %1345
      %v1348 = vrot.slane %v1213, 4
      %1349 = vrot.lane.b32.xlu0 %v1348, 96
      %v1350 = vpop.permute.xlu0 %1349
      %v1352 = vrot.slane %v1213, 5
      %1353 = vrot.lane.b32.xlu0 %v1352, 104
      %v1354 = vpop.permute.xlu0 %1353
      %v1356 = vrot.slane %v1213, 6
      %1357 = vrot.lane.b32.xlu0 %v1356, 112
      %v1358 = vpop.permute.xlu0 %1357
      %v1360 = vrot.slane %v1213, 7
      %1361 = vrot.lane.b32.xlu0 %v1360, 120
      %v1362 = vpop.permute.xlu0 %1361
      %v1364 = vsel %vm985, %v1212, %v1306
      %v1365 = vsel %vm1276, %v1364, %v1310
      %v1366 = vsel %vm1278, %v1365, %v1314
      %v1367 = vsel %vm368, %v1366, %v1318
      %v1368 = vsel %vm1281, %v1367, %v1322
      %v1369 = vsel %vm1283, %v1368, %v1326
      %v1370 = vsel %vm1285, %v1369, %v1330
      %v1371 = vsel %vm1287, %v1370, %v1334
      %v1372 = vsel %vm1289, %v1371, %v1338
      %v1373 = vsel %vm1291, %v1372, %v1342
      %v1374 = vsel %vm1293, %v1373, %v1346
      %v1375 = vsel %vm1295, %v1374, %v1350
      %v1376 = vsel %vm1297, %v1375, %v1354
      %v1377 = vsel %vm1299, %v1376, %v1358
      %v1378 = vsel %vm1301, %v1377, %v1362
      %v1381 = vcombine.low %v1302, %v1378
      %v1383 = vunpack.c.l.s4 1966171168
      %v1384 = vunpack.c.0.s8 %v1383
      %v1385 = vlaneseq
      %v1386 = vshrl.u32 %v1385, 7
      %v1387 = vsub.s32 %v1384, %v1386
      %v1388 = vrot.slane %v1381, %v1387
      %v1390 = vunpack.c.l.s4 1966171168
      %v1391 = vunpack.c.0.s8 %v1390
      %v1392 = vlaneseq
      %v1393 = vshrl.u32 %v1392, 7
      %v1394 = vsub.s32 %v1391, %v1393
      %v1395 = vrot.slane %v1388, %v1394
      %v1397 = vlaneseq
      %vm1398 = vcmp.ge.s32.totalorder %v1397, 0
      %vm1399 = vcmp.lt.s32.totalorder %v1397, 256
      %vm1400 = vmand %vm1398, %vm1399
      %1401 = vst.msk [vmem:[%s345] sm:$0x3] %vm1400, %v1395
      %v1402 = vpack.c.bf16 %v1210, %v1210
      %v1403 = vpack.c.bf16 %v1211, %v1211
      %v1404 = vpack.c.bf16 %v1212, %v1212
      %v1405 = vpack.c.bf16 %v1213, %v1213
      %v1407 = vsel %vm985, %v1402, 0
      %vm1409 = vcmask 1043456
      %v1411 = vsel %vm1409, %v981, 0
      %1413 = vmatprep.subr.bf16.mxu0 0
      %1414 = vmatpush1.bf16.msra.mxu0 0
      %1415 = vmatprep.subr.bf16.mxu0 0
      %1416 = vmatpush1.bf16.msra.mxu0 0
      %1417 = vmatprep.subr.bf16.mxu0 0
      %1418 = vmatpush1.bf16.msra.mxu0 0
      %1419 = vmatprep.subr.bf16.mxu0 0
      %1420 = vmatpush1.bf16.msra.mxu0 0
      %1421 = vmatprep.subr.bf16.mxu0 0
      %1422 = vmatpush1.bf16.msra.mxu0 0
      %1423 = vmatprep.subr.bf16.mxu0 0
      %1424 = vmatpush1.bf16.msra.mxu0 0
      %1425 = vmatprep.subr.bf16.mxu0 0
      %1426 = vmatpush1.bf16.msra.mxu0 0
      %1427 = vmatprep.subr.bf16.mxu0 0
      %1428 = vmatpush1.bf16.msra.mxu0 %v1411
      %1429 = vmatprep.subr.bf16.mxu0 0
      %1430 = vmatpush2.bf16.msra.mxu0 0
      %1431 = vmatprep.subr.bf16.mxu0 0
      %1432 = vmatpush2.bf16.msra.mxu0 0
      %1433 = vmatprep.subr.bf16.mxu0 0
      %1434 = vmatpush2.bf16.msra.mxu0 0
      %1435 = vmatprep.subr.bf16.mxu0 0
      %1436 = vmatpush2.bf16.msra.mxu0 0
      %1437 = vmatprep.subr.bf16.mxu0 0
      %1438 = vmatpush2.bf16.msra.mxu0 0
      %1439 = vmatprep.subr.bf16.mxu0 0
      %1440 = vmatpush2.bf16.msra.mxu0 0
      %1441 = vmatprep.subr.bf16.mxu0 0
      %1442 = vmatpush2.bf16.msra.mxu0 0
      %1443 = vmatprep.subr.bf16.mxu0 0
      %1444 = vmatpush2.bf16.msra.mxu0 0
      %1445 = vmatprep.mubr.bf16.mxu0 0
      %1446 = vmatmul.mubr.bf16.gmra.mxu0 %v1407
      %v1447 = vpop.f32.mrf.mxu0
      %v1448 = vadd.f32 0.0, %v1447
      %v1449 = vpop.f32.mrf.mxu0
      %v1450 = vpop.f32.mrf.mxu0
      %v1451 = vpop.f32.mrf.mxu0
      %1452 = vdwg.mxu0
      %v1454 = vsel %vm985, %v1403, 0
      %v1457 = vsel %vm1409, %v982, 0
      %1459 = vmatprep.subr.bf16.mxu0 0
      %1460 = vmatpush1.bf16.msra.mxu0 0
      %1461 = vmatprep.subr.bf16.mxu0 0
      %1462 = vmatpush1.bf16.msra.mxu0 0
      %1463 = vmatprep.subr.bf16.mxu0 0
      %1464 = vmatpush1.bf16.msra.mxu0 0
      %1465 = vmatprep.subr.bf16.mxu0 0
      %1466 = vmatpush1.bf16.msra.mxu0 0
      %1467 = vmatprep.subr.bf16.mxu0 0
      %1468 = vmatpush1.bf16.msra.mxu0 0
      %1469 = vmatprep.subr.bf16.mxu0 0
      %1470 = vmatpush1.bf16.msra.mxu0 0
      %1471 = vmatprep.subr.bf16.mxu0 0
      %1472 = vmatpush1.bf16.msra.mxu0 0
      %1473 = vmatprep.subr.bf16.mxu0 0
      %1474 = vmatpush1.bf16.msra.mxu0 %v1457
      %1475 = vmatprep.subr.bf16.mxu0 0
      %1476 = vmatpush2.bf16.msra.mxu0 0
      %1477 = vmatprep.subr.bf16.mxu0 0
      %1478 = vmatpush2.bf16.msra.mxu0 0
      %1479 = vmatprep.subr.bf16.mxu0 0
      %1480 = vmatpush2.bf16.msra.mxu0 0
      %1481 = vmatprep.subr.bf16.mxu0 0
      %1482 = vmatpush2.bf16.msra.mxu0 0
      %1483 = vmatprep.subr.bf16.mxu0 0
      %1484 = vmatpush2.bf16.msra.mxu0 0
      %1485 = vmatprep.subr.bf16.mxu0 0
      %1486 = vmatpush2.bf16.msra.mxu0 0
      %1487 = vmatprep.subr.bf16.mxu0 0
      %1488 = vmatpush2.bf16.msra.mxu0 0
      %1489 = vmatprep.subr.bf16.mxu0 0
      %1490 = vmatpush2.bf16.msra.mxu0 0
      %1491 = vmatprep.mubr.bf16.mxu0 0
      %1492 = vmatmul.mubr.bf16.gmra.mxu0 %v1454
      %v1493 = vpop.f32.mrf.mxu0
      %v1494 = vadd.f32 0.0, %v1493
      %v1495 = vpop.f32.mrf.mxu0
      %v1496 = vpop.f32.mrf.mxu0
      %v1497 = vpop.f32.mrf.mxu0
      %1498 = vdwg.mxu0
      %v1500 = vsel %vm985, %v1404, 0
      %v1503 = vsel %vm1409, %v983, 0
      %1505 = vmatprep.subr.bf16.mxu0 0
      %1506 = vmatpush1.bf16.msra.mxu0 0
      %1507 = vmatprep.subr.bf16.mxu0 0
      %1508 = vmatpush1.bf16.msra.mxu0 0
      %1509 = vmatprep.subr.bf16.mxu0 0
      %1510 = vmatpush1.bf16.msra.mxu0 0
      %1511 = vmatprep.subr.bf16.mxu0 0
      %1512 = vmatpush1.bf16.msra.mxu0 0
      %1513 = vmatprep.subr.bf16.mxu0 0
      %1514 = vmatpush1.bf16.msra.mxu0 0
      %1515 = vmatprep.subr.bf16.mxu0 0
      %1516 = vmatpush1.bf16.msra.mxu0 0
      %1517 = vmatprep.subr.bf16.mxu0 0
      %1518 = vmatpush1.bf16.msra.mxu0 0
      %1519 = vmatprep.subr.bf16.mxu0 0
      %1520 = vmatpush1.bf16.msra.mxu0 %v1503
      %1521 = vmatprep.subr.bf16.mxu0 0
      %1522 = vmatpush2.bf16.msra.mxu0 0
      %1523 = vmatprep.subr.bf16.mxu0 0
      %1524 = vmatpush2.bf16.msra.mxu0 0
      %1525 = vmatprep.subr.bf16.mxu0 0
      %1526 = vmatpush2.bf16.msra.mxu0 0
      %1527 = vmatprep.subr.bf16.mxu0 0
      %1528 = vmatpush2.bf16.msra.mxu0 0
      %1529 = vmatprep.subr.bf16.mxu0 0
      %1530 = vmatpush2.bf16.msra.mxu0 0
      %1531 = vmatprep.subr.bf16.mxu0 0
      %1532 = vmatpush2.bf16.msra.mxu0 0
      %1533 = vmatprep.subr.bf16.mxu0 0
      %1534 = vmatpush2.bf16.msra.mxu0 0
      %1535 = vmatprep.subr.bf16.mxu0 0
      %1536 = vmatpush2.bf16.msra.mxu0 0
      %1537 = vmatprep.mubr.bf16.mxu0 0
      %1538 = vmatmul.mubr.bf16.gmra.mxu0 %v1500
      %v1539 = vpop.f32.mrf.mxu0
      %v1540 = vadd.f32 0.0, %v1539
      %v1541 = vpop.f32.mrf.mxu0
      %v1542 = vpop.f32.mrf.mxu0
      %v1543 = vpop.f32.mrf.mxu0
      %1544 = vdwg.mxu0
      %v1546 = vsel %vm985, %v1405, 0
      %v1549 = vsel %vm1409, %v984, 0
      %1551 = vmatprep.subr.bf16.mxu0 0
      %1552 = vmatpush1.bf16.msra.mxu0 0
      %1553 = vmatprep.subr.bf16.mxu0 0
      %1554 = vmatpush1.bf16.msra.mxu0 0
      %1555 = vmatprep.subr.bf16.mxu0 0
      %1556 = vmatpush1.bf16.msra.mxu0 0
      %1557 = vmatprep.subr.bf16.mxu0 0
      %1558 = vmatpush1.bf16.msra.mxu0 0
      %1559 = vmatprep.subr.bf16.mxu0 0
      %1560 = vmatpush1.bf16.msra.mxu0 0
      %1561 = vmatprep.subr.bf16.mxu0 0
      %1562 = vmatpush1.bf16.msra.mxu0 0
      %1563 = vmatprep.subr.bf16.mxu0 0
      %1564 = vmatpush1.bf16.msra.mxu0 0
      %1565 = vmatprep.subr.bf16.mxu0 0
      %1566 = vmatpush1.bf16.msra.mxu0 %v1549
      %1567 = vmatprep.subr.bf16.mxu0 0
      %1568 = vmatpush2.bf16.msra.mxu0 0
      %1569 = vmatprep.subr.bf16.mxu0 0
      %1570 = vmatpush2.bf16.msra.mxu0 0
      %1571 = vmatprep.subr.bf16.mxu0 0
      %1572 = vmatpush2.bf16.msra.mxu0 0
      %1573 = vmatprep.subr.bf16.mxu0 0
      %1574 = vmatpush2.bf16.msra.mxu0 0
      %1575 = vmatprep.subr.bf16.mxu0 0
      %1576 = vmatpush2.bf16.msra.mxu0 0
      %1577 = vmatprep.subr.bf16.mxu0 0
      %1578 = vmatpush2.bf16.msra.mxu0 0
      %1579 = vmatprep.subr.bf16.mxu0 0
      %1580 = vmatpush2.bf16.msra.mxu0 0
      %1581 = vmatprep.subr.bf16.mxu0 0
      %1582 = vmatpush2.bf16.msra.mxu0 0
      %1583 = vmatprep.mubr.bf16.mxu0 0
      %1584 = vmatmul.mubr.bf16.gmra.mxu0 %v1546
      %v1585 = vpop.f32.mrf.mxu0
      %v1586 = vadd.f32 0.0, %v1585
      %v1587 = vpop.f32.mrf.mxu0
      %v1588 = vpop.f32.mrf.mxu0
      %v1589 = vpop.f32.mrf.mxu0
      %1590 = vdwg.mxu0
      %1592 = vrot.lane.b32.xlu0 %v1494, 8
      %v1593 = vpop.permute.xlu0 %1592
      %1596 = vrot.lane.b32.xlu0 %v1540, 16
      %v1597 = vpop.permute.xlu0 %1596
      %1600 = vrot.lane.b32.xlu0 %v1586, 24
      %v1601 = vpop.permute.xlu0 %1600
      %v1603 = vsel %vm985, %v1448, %v1593
      %v1604 = vsel %vm1276, %v1603, %v1597
      %v1605 = vsel %vm1278, %v1604, %v1601
      %v1606 = vpack.c.bf16 %v1605, %v1605
      %s1607 = scalar_lea.vmem %s4, 96
      %v1608 = vld [vmem:[%s1607] sm:$0xff]
      %v1609 = vld [vmem:[%s1607 + $0x8] sm:$0xff]
      %v1610 = vld [vmem:[%s1607 + $0x10] sm:$0xff]
      %v1611 = vld [vmem:[%s1607 + $0x18] sm:$0xff]
      %v1612 = vpack.c.bf16 %v1609, %v1608
      %v1613 = vpack.c.bf16 %v1611, %v1610
      %v1614 = vld [vmem:[%s6] sm:$0x1]
      %v1616 = vlaneseq
      %v1617 = vshrl.u32 %v1616, 7
      %v1618 = vsub.s32 0, %v1617
      %v1619 = vrot.slane %v1614, %v1618
      %v1622 = vsel %vm368, %v1606, 0
      %v1625 = vsel %vm368, %v1612, 0
      %v1628 = vsel %vm368, %v1613, 0
      %1630 = vmatprep.subr.bf16.mxu0 0
      %1631 = vmatpush1.bf16.xpose.msra.mxu0 0
      %1632 = vmatprep.subr.bf16.mxu0 0
      %1633 = vmatpush1.bf16.xpose.msra.mxu0 0
      %1634 = vmatprep.subr.bf16.mxu0 0
      %1635 = vmatpush1.bf16.xpose.msra.mxu0 0
      %1636 = vmatprep.subr.bf16.mxu0 0
      %1637 = vmatpush1.bf16.xpose.msra.mxu0 0
      %1638 = vmatprep.subr.bf16.mxu0 0
      %1639 = vmatpush1.bf16.xpose.msra.mxu0 0
      %1640 = vmatprep.subr.bf16.mxu0 0
      %1641 = vmatpush1.bf16.xpose.msra.mxu0 0
      %1642 = vmatprep.subr.bf16.mxu0 0
      %1643 = vmatpush1.bf16.xpose.msra.mxu0 %v1628
      %1644 = vmatprep.subr.bf16.mxu0 0
      %1645 = vmatpush1.bf16.xpose.msra.mxu0 %v1625
      %1646 = vmatprep.subr.bf16.mxu0 0
      %1647 = vmatpush2.bf16.xpose.msra.mxu0 0
      %1648 = vmatprep.subr.bf16.mxu0 0
      %1649 = vmatpush2.bf16.xpose.msra.mxu0 0
      %1650 = vmatprep.subr.bf16.mxu0 0
      %1651 = vmatpush2.bf16.xpose.msra.mxu0 0
      %1652 = vmatprep.subr.bf16.mxu0 0
      %1653 = vmatpush2.bf16.xpose.msra.mxu0 0
      %1654 = vmatprep.subr.bf16.mxu0 0
      %1655 = vmatpush2.bf16.xpose.msra.mxu0 0
      %1656 = vmatprep.subr.bf16.mxu0 0
      %1657 = vmatpush2.bf16.xpose.msra.mxu0 0
      %1658 = vmatprep.subr.bf16.mxu0 0
      %1659 = vmatpush2.bf16.xpose.msra.mxu0 0
      %1660 = vmatprep.subr.bf16.mxu0 0
      %1661 = vmatpush2.bf16.xpose.msra.mxu0 0
      %1662 = vmatprep.mubr.bf16.mxu0 0
      %1663 = vmatmul.mubr.bf16.gmra.mxu0 %v1622
      %v1664 = vpop.f32.mrf.mxu0
      %v1665 = vadd.f32 %v1619, %v1664
      %v1666 = vpop.f32.mrf.mxu0
      %v1667 = vpop.f32.mrf.mxu0
      %v1668 = vpop.f32.mrf.mxu0
      %1669 = vdwg.mxu0
      %v1671 = vrot.slane %v1665, 1
      %1672 = vrot.lane.b32.xlu0 %v1671, 32
      %v1673 = vpop.permute.xlu0 %1672
      %v1675 = vrot.slane %v1665, 2
      %1676 = vrot.lane.b32.xlu0 %v1675, 64
      %v1677 = vpop.permute.xlu0 %1676
      %v1679 = vrot.slane %v1665, 3
      %1680 = vrot.lane.b32.xlu0 %v1679, 96
      %v1681 = vpop.permute.xlu0 %1680
      %v1683 = vrot.slane %v1665, 4
      %v1685 = vrot.slane %v1665, 5
      %1686 = vrot.lane.b32.xlu0 %v1685, 32
      %v1687 = vpop.permute.xlu0 %1686
      %v1689 = vrot.slane %v1665, 6
      %1690 = vrot.lane.b32.xlu0 %v1689, 64
      %v1691 = vpop.permute.xlu0 %1690
      %v1693 = vrot.slane %v1665, 7
      %1694 = vrot.lane.b32.xlu0 %v1693, 96
      %v1695 = vpop.permute.xlu0 %1694
      %v1697 = vsel %vm368, %v1665, %v1673
      %v1698 = vsel %vm1287, %v1697, %v1677
      %v1699 = vsel %vm1295, %v1698, %v1681
      %v1700 = vsel %vm368, %v1683, %v1687
      %v1701 = vsel %vm1287, %v1700, %v1691
      %v1702 = vsel %vm1295, %v1701, %v1695
      %v1705 = vcombine.low %v1699, %v1702
      %v1707 = vunpack.c.l.s4 1966171168
      %v1708 = vunpack.c.0.s8 %v1707
      %v1709 = vlaneseq
      %v1710 = vshrl.u32 %v1709, 7
      %v1711 = vsub.s32 %v1708, %v1710
      %v1712 = vrot.slane %v1705, %v1711
      %v1714 = vunpack.c.l.s4 1966171168
      %v1715 = vunpack.c.0.s8 %v1714
      %v1716 = vlaneseq
      %v1717 = vshrl.u32 %v1716, 7
      %v1718 = vsub.s32 %v1715, %v1717
      %v1719 = vrot.slane %v1712, %v1718
      %1721 = vst.msk [vmem:[%s341] sm:$0x3] %vm1400, %v1719
      %p1722 = scmp.lt.s32.totalorder %s20, 1
      %s1723 = scalar_select %p1722, %s20, 1
      %s1724 = smul.addr %s1723, 2
      %s1725 = scalar_lea.vmem %s7, %s1724
      %p1726 = scmp.lt.s32.totalorder %s20, 1
      %s1727 = scalar_select %p1726, %s20, 1
      %s1728 = smul.addr %s1727, 2
      %s1729 = scalar_lea.vmem %s8, %s1728
      // Predicated region
      $region49: #{_mha_forward_impl.1} parent=47 // pred_check
        %p1730 = pneg %p200
      $region50: #{_mha_forward_impl.1} parent=47 // pred_check_branch
        %1732 = sbr.rel (%p1730) target = $region52
      $region51: #{_mha_forward_impl.1} parent=47 // pred_region
        _
      $region52: #{_mha_forward_impl.1} parent=47 // pred_fallthru
        _
      // Predicated region
      $region53: #{_mha_forward_impl.1} parent=47 // pred_check
        %p1733 = pneg %p226
      $region54: #{_mha_forward_impl.1} parent=47 // pred_check_branch
        %1735 = sbr.rel (%p1733) target = $region56
      $region55: #{_mha_forward_impl.1} parent=47 // pred_region
        _
      $region56: #{_mha_forward_impl.1} parent=47 // pred_fallthru
        _
    $region48: #{_mha_forward_impl.1} parent=5 // pred_fallthru
      _
    %p1736 = scmp.le.s32.totalorder 2, %s15
    // Predicated region
    $region57: #{_mha_forward_impl.1} parent=5 // pred_check
      %p1737 = pneg %p1736
    $region58: #{_mha_forward_impl.1} parent=5 // pred_check_branch
      %1739 = sbr.rel (%p1737) target = $region60
    $region59: #{_mha_forward_impl.1} parent=5 // pred_region
      %s1740 = ssub.s32 %s15, 2
      // Predicated region
      $region61: #{_mha_forward_impl.1} parent=59 // pred_check
        %p1741 = pneg %p206
      $region62: #{_mha_forward_impl.1} parent=59 // pred_check_branch
        %1743 = sbr.rel (%p1741) target = $region64
      $region63: #{_mha_forward_impl.1} parent=59 // pred_region
        %p1744 = scmp.lt.s32.totalorder %s21, 1
        %s1745 = scalar_select %p1744, %s21, 1
        %s1746 = smul.addr %s1745, 2
        %s1747 = scalar_lea.vmem %s7, %s1746
      $region64: #{_mha_forward_impl.1} parent=59 // pred_fallthru
        _
      // Predicated region
      $region65: #{_mha_forward_impl.1} parent=59 // pred_check
        %p1748 = pneg %p232
      $region66: #{_mha_forward_impl.1} parent=59 // pred_check_branch
        %1750 = sbr.rel (%p1748) target = $region68
      $region67: #{_mha_forward_impl.1} parent=59 // pred_region
        %p1751 = scmp.lt.s32.totalorder %s21, 1
        %s1752 = scalar_select %p1751, %s21, 1
        %s1753 = smul.addr %s1752, 2
        %s1754 = scalar_lea.vmem %s8, %s1753
      $region68: #{_mha_forward_impl.1} parent=59 // pred_fallthru
        _
    $region60: #{_mha_forward_impl.1} parent=5 // pred_fallthru
      _
  $region6: #{_mha_forward_impl.1} parent=0 // loop_footer
    %s19 = sadd.s32 1, %s15
  $region7: #{_mha_forward_impl.1} parent=0 // loop_footer_branch
    %14 = sbr.rel target = $region3
  $region8: #{_mha_forward_impl.1} parent=0 // loop_exit
    _

</llo_original>
